<compile_context>
chip_gen: v7x
topology: tpu7x:2x2x1
jax: 0.10.0
libtpu: 0.0.40
codegen_flags: <defaults>
</compile_context>

<pallas_src>
import functools
import math

import jax
import jax.numpy as jnp
from jax import lax
from jax.experimental import pallas as pl
from jax.experimental.pallas import tpu as pltpu


def _round_up(x, m):
    return ((x + m - 1) // m) * m


# ---------------------------------------------------------------------------
# Pallas kernel: out = relu_maybe(x @ w + bias) on one (tm, tn) output tile.
# x is the bf16 im2col patch matrix (K zero-padded), w the bf16 weight matrix
# with the BN scale folded into its columns (K rows zero-padded to match),
# bias the folded BN bias (f32). K fits in a single block -> no reduction grid
# axis, no accumulator scratch.
# ---------------------------------------------------------------------------
def _mm_bias_act_kernel(x_ref, w_ref, b_ref, o_ref, *, relu):
    acc = jnp.dot(x_ref[...], w_ref[...], preferred_element_type=jnp.float32)
    y = acc + b_ref[...]
    if relu:
        y = jnp.maximum(y, 0.0)
    o_ref[...] = y.astype(o_ref.dtype)


def _choose_tiles(M, Np):
    """Pick (tm, tn, Mp) for the fused matmul.

    * tn = 256 matches the 256-wide MXU of v6e/v7x when Np allows it,
      otherwise 128 (also the right width for v5e's 128-wide MXU).
    * tm is as large as possible (cap 512) and preferably a divisor of M so
      no M padding / extra HBM copy is needed.
    * If the resulting grid would be a single block, split the M axis in two
      (only when M >= 256 so the extra grid step is amortized) so both v7x
      TensorCores get work via the "parallel" dimension semantics.
    """
    tn = 256 if (Np % 256 == 0) else 128
    cap = 512
    if M <= cap and M % 8 == 0:
        tm = M
    else:
        tm = None
        for cand in range(min(cap, (M // 8) * 8), 7, -8):
            if M % cand == 0:
                tm = cand
                break
        if tm is None:
            tm = min(cap, _round_up(M, 16))
    if (pl.cdiv(M, tm) * (Np // tn)) == 1 and M >= 256 and (M // 2) % 16 == 0:
        tm = M // 2
    Mp = _round_up(M, tm)
    return tm, tn, Mp


def matmul_bias_act(cols, wm, bias, relu):
    """cols:(M,K) bf16, wm:(K,Np) bf16 (Np % 128 == 0), bias:(1,Np) f32."""
    M, K = cols.shape
    Kw, Np = wm.shape
    assert K == Kw and Np % 128 == 0

    tm, tn, Mp = _choose_tiles(M, Np)
    if Mp != M:
        cols = jnp.pad(cols, ((0, Mp - M), (0, 0)))

    grid = (Mp // tm, Np // tn)
    out_dtype = jnp.bfloat16
    cost = pl.CostEstimate(
        flops=2 * Mp * K * Np,
        transcendentals=0,
        bytes_accessed=(Mp * K * cols.dtype.itemsize
                        + K * Np * wm.dtype.itemsize
                        + Np * 4
                        + Mp * Np * jnp.dtype(out_dtype).itemsize),
    )
    # Double-buffered inputs + outputs; clamp to [4 MiB, 32 MiB] so the
    # request is valid on every generation (incl. v7x's 64 MiB physical VMEM).
    vmem_need = 2 * (tm * K * 2 + K * tn * 2 + tn * 4) + 2 * tm * tn * 2
    vmem_limit = int(min(max(2 * vmem_need, 4 << 20), 32 << 20))

    out = pl.pallas_call(
        functools.partial(_mm_bias_act_kernel, relu=relu),
        out_shape=jax.ShapeDtypeStruct((Mp, Np), out_dtype),
        grid_spec=pltpu.PrefetchScalarGridSpec(
            num_scalar_prefetch=0,
            grid=grid,
            in_specs=[
                pl.BlockSpec((tm, K), lambda i, j: (i, 0)),
                pl.BlockSpec((K, tn), lambda i, j: (0, j)),
                pl.BlockSpec((1, tn), lambda i, j: (0, j)),
            ],
            out_specs=pl.BlockSpec((tm, tn), lambda i, j: (i, j)),
        ),
        compiler_params=pltpu.CompilerParams(
            dimension_semantics=("parallel", "parallel"),
            vmem_limit_bytes=vmem_limit,
        ),
        cost_estimate=cost,
    )(cols, wm, bias)
    return out


# ---------------------------------------------------------------------------
# Conv (im2col + fused Pallas matmul), pooling, SwitchNorm glue
# ---------------------------------------------------------------------------
def _im2col(x, kh, kw, stride, padding):
    """x: NHWC -> (N*OH*OW, Kp). 1x1/stride-1 convs are a pure reshape (K=Cin);
    kh*kw>1 convs get K zero-padded to a multiple of 128 (appended as one zero
    chunk in the concat) for lane-aligned, unmasked kernel loads."""
    n, h, w, c = x.shape
    oh = (h + 2 * padding - kh) // stride + 1
    ow = (w + 2 * padding - kw) // stride + 1
    if kh == 1 and kw == 1 and stride == 1 and padding == 0:
        return x.reshape(n * oh * ow, c), (n, oh, ow)
    if padding > 0:
        x = jnp.pad(x, ((0, 0), (padding, padding), (padding, padding), (0, 0)))
    k_real = kh * kw * c
    kp = _round_up(k_real, 128) if (kh > 1 or kw > 1) else k_real
    # TODO(synk): a fully fused in-kernel im2col (shifted-window loads from a
    # VMEM-resident padded activation) was evaluated but deferred: the
    # (N,OH,OW,C)->(M,C) value reshape with OW not a multiple of the sublane
    # tile risks Mosaic lowering failures at these small spatial widths.
    patches = []
    for i in range(kh):
        for j in range(kw):
            patches.append(
                x[:, i:i + stride * oh:stride, j:j + stride * ow:stride, :])
    if kp != k_real:
        patches.append(jnp.zeros((n, oh, ow, kp - k_real), x.dtype))
    cols = jnp.concatenate(patches, axis=-1)          # (N,OH,OW,Kp)
    return cols.reshape(n * oh * ow, kp), (n, oh, ow)


def conv_bn_relu(x_nhwc, p, cfg):
    cols, (n, oh, ow) = _im2col(x_nhwc, cfg["kh"], cfg["kw"],
                                cfg["stride"], cfg["padding"])
    y = matmul_bias_act(cols, p["wm"], p["bias"], relu=cfg["relu"])
    cout = cfg["cout"]
    m = n * oh * ow
    if y.shape[0] != m:
        y = y[:m]
    # Lane-dense Np-wide kernel output; this :cout slice stays lazy and fuses
    # into the next layer's im2col / pooling consumer under jit.
    return y[:, :cout].reshape(n, oh, ow, cout)


def max_pool_3x3_s2_p1(x):  # NHWC
    return lax.reduce_window(
        x, jnp.array(-jnp.inf, x.dtype), lax.max,
        window_dimensions=(1, 3, 3, 1), window_strides=(1, 2, 2, 1),
        padding=((0, 0), (1, 1), (1, 1), (0, 0)))


def avg_pool_2x2_s2(x):  # NHWC
    # TODO(synk): the Conv1x1 + AvgPool2d tail of each stage could be fused
    # into one kernel epilogue; ReLU between them prevents reordering and the
    # in-kernel 2x2 row-group reduction needs a sublane-splitting reshape, so
    # it stays as an XLA reduce_window for now.
    s = lax.reduce_window(
        x, jnp.array(0, x.dtype), lax.add,
        window_dimensions=(1, 2, 2, 1), window_strides=(1, 2, 2, 1),
        padding=((0, 0), (0, 0), (0, 0), (0, 0)))
    return s * jnp.array(0.25, x.dtype)


def switch_norm_affine(x, p, eps=1e-5):
    """Inference-mode SwitchNorm2d with the trailing gamma*x+beta folded in."""
    xf = x.astype(jnp.float32)                            # stats in f32
    mean_in = jnp.mean(xf, axis=(1, 2), keepdims=True)    # (N,1,1,C)
    var_in = jnp.var(xf, axis=(1, 2), keepdims=True)
    mean_ln = jnp.mean(mean_in, axis=-1, keepdims=True)   # (N,1,1,1)
    var_ln = jnp.mean(var_in + mean_in ** 2, axis=-1, keepdims=True) - mean_ln ** 2
    mean_bn = p["running_mean"].reshape(1, 1, 1, -1)
    var_bn = p["running_var"].reshape(1, 1, 1, -1)
    mw = jax.nn.softmax(p["mean_weight"])
    vw = jax.nn.softmax(p["var_weight"])
    mean = mw[0] * mean_in + mw[1] * mean_ln + mw[2] * mean_bn
    var = vw[0] * var_in + vw[1] * var_ln + vw[2] * var_bn
    g = p["gamma"].reshape(1, 1, 1, -1)
    eff_w = p["weight"].reshape(1, 1, 1, -1) * g
    eff_b = p["bias"].reshape(1, 1, 1, -1) * g + p["beta"].reshape(1, 1, 1, -1)
    xn = (xf - mean) * lax.rsqrt(var + eps)
    return (xn * eff_w + eff_b).astype(x.dtype)


# ---------------------------------------------------------------------------
# Parameter construction (deterministic, mirrors _init_params); BN folded and
# weight matrices pre-transposed / pre-padded (K and N) / cast to bf16 at init.
# ---------------------------------------------------------------------------
def _kaiming_normal(key, cout, cin, kh, kw):
    fan_out = cout * kh * kw
    std = math.sqrt(2.0 / fan_out)
    return jax.random.normal(key, (cout, cin, kh, kw), jnp.float32) * std


def _make_conv_params(key, cin, cout, k, eps=1e-5):
    w = _kaiming_normal(key, cout, cin, k, k)          # torch (Cout,Cin,kh,kw)
    gamma = jnp.ones((cout,), jnp.float32)
    beta = jnp.zeros((cout,), jnp.float32)
    rmean = jnp.zeros((cout,), jnp.float32)
    rvar = jnp.ones((cout,), jnp.float32)
    scale = gamma / jnp.sqrt(rvar + eps)               # BN scale -> fold into W
    bias = beta - rmean * scale                        # BN bias  -> epilogue add
    k_real = k * k * cin
    wm = jnp.transpose(w, (2, 3, 1, 0)).reshape(k_real, cout) * scale[None, :]
    kp = _round_up(k_real, 128) if k > 1 else k_real   # match _im2col's K pad
    np_ = _round_up(cout, 128)
    wm = jnp.pad(wm, ((0, kp - k_real), (0, np_ - cout))).astype(jnp.bfloat16)
    bias = jnp.pad(bias.reshape(1, cout), ((0, 0), (0, np_ - cout)))
    return {"wm": wm, "bias": bias.astype(jnp.float32)}


def build_osnet(key, channels=(8, 16, 24, 32), layers=(1, 1, 1)):
    keys = iter(jax.random.split(key, 64))
    params = {}          # arrays only (jit-traceable pytree)
    ops = []             # static (kind, cfg, param_name) program
    idx = [0]

    def add_conv(cin, cout, k, stride, padding, relu=True):
        name = f"conv_{idx[0]}"
        idx[0] += 1
        params[name] = _make_conv_params(next(keys), cin, cout, k)
        ops.append(("conv",
                    dict(kh=k, kw=k, cout=cout, stride=stride,
                         padding=padding, relu=relu), name))

    def add_stage(cin, cout, nlayer, reduce_spatial):
        # TODO(synk): OSBlock source is not provided; approximated by a
        # ConvLayer-style 3x3 Conv+BN+ReLU.
        add_conv(cin, cout, 3, 1, 1)
        for _ in range(1, nlayer):
            add_conv(cout, cout, 3, 1, 1)
        if reduce_spatial:
            add_conv(cout, cout, 1, 1, 0)              # Conv1x1
            ops.append(("avgpool", None, None))

    add_conv(3, channels[0], 7, 2, 3)                  # conv1
    ops.append(("maxpool", None, None))
    add_stage(channels[0], channels[1], layers[0], True)       # conv2
    c1 = channels[1]
    # TODO(synk): original hard-codes SwitchNorm2d(64*4); channel count here
    # tracks channels[1] so shapes are consistent.
    params["sw1"] = dict(
        weight=jnp.ones((c1,), jnp.float32), bias=jnp.zeros((c1,), jnp.float32),
        mean_weight=jnp.ones((3,), jnp.float32), var_weight=jnp.ones((3,), jnp.float32),
        running_mean=jnp.zeros((c1,), jnp.float32), running_var=jnp.ones((c1,), jnp.float32),
        gamma=jnp.ones((c1,), jnp.float32), beta=jnp.zeros((c1,), jnp.float32))
    ops.append(("swnorm", None, "sw1"))
    add_stage(channels[1], channels[2], layers[1], True)       # conv3
    add_stage(channels[2], channels[3], layers[2], False)      # conv4
    add_conv(channels[3], channels[3], 1, 1, 0)                # conv5 (Conv1x1)
    return params, ops


def osnet_forward(ops, params, x_nchw):
    x = jnp.transpose(x_nchw, (0, 2, 3, 1)).astype(jnp.bfloat16)   # NCHW->NHWC
    for kind, cfg, name in ops:
        if kind == "conv":
            x = conv_bn_relu(x, params[name], cfg)
        elif kind == "maxpool":
            x = max_pool_3x3_s2_p1(x)
        elif kind == "avgpool":
            x = avg_pool_2x2_s2(x)
        elif kind == "swnorm":
            x = switch_norm_affine(x, params[name])
    return jnp.transpose(x, (0, 3, 1, 2)).astype(jnp.float32)      # NHWC->NCHW


if __name__ == "__main__":
    key = jax.random.PRNGKey(0)
    kx, kp = jax.random.split(key)
    x = jax.random.normal(kx, (2, 3, 32, 32), jnp.float32)     # NCHW like PyTorch
    params, ops = build_osnet(kp, channels=(8, 16, 24, 32), layers=(1, 1, 1))

    fwd = jax.jit(functools.partial(osnet_forward, ops))
    out = jax.block_until_ready(fwd(params, x))
    assert out.shape == (2, 32, 2, 2), out.shape
    assert out.dtype == jnp.float32
    assert bool(jnp.all(jnp.isfinite(out)))
    print("KERNEL_OK")
</pallas_src>

<mosaic_0001>
module attributes {stable_mosaic.version = 11 : i64} {
  func.func @_mm_bias_act_kernel(%arg0: i32, %arg1: i32, %arg2: memref<256x256xbf16, #tpu.memory_space<vmem>>, %arg3: memref<256x128xbf16, #tpu.memory_space<vmem>>, %arg4: memref<1x128xf32, #tpu.memory_space<vmem>>, %arg5: memref<256x128xbf16, #tpu.memory_space<vmem>>) attributes {dimension_semantics = [#tpu.dimension_semantics<parallel>, #tpu.dimension_semantics<parallel>], iteration_bounds = array<i64: 2, 1>, scalar_prefetch = 0 : i64, scratch_operands = 0 : i64, tpu.core_type = #tpu.core_type<tc>, window_params = [{transform_indices = @transform_0, window_bounds = array<i64: 256, 256>}, {transform_indices = @transform_1, window_bounds = array<i64: 256, 128>}, {transform_indices = @transform_2, window_bounds = array<i64: 1, 128>}, {transform_indices = @transform_3, window_bounds = array<i64: 256, 128>}]} {
    %c0 = arith.constant 0 : index
    %c0_0 = arith.constant 0 : index
    %0 = vector.load %arg2[%c0, %c0_0] : memref<256x256xbf16, #tpu.memory_space<vmem>>, vector<256x256xbf16>
    %c0_1 = arith.constant 0 : index
    %c0_2 = arith.constant 0 : index
    %1 = vector.load %arg3[%c0_1, %c0_2] : memref<256x128xbf16, #tpu.memory_space<vmem>>, vector<256x128xbf16>
    %cst = arith.constant dense<0.000000e+00> : vector<256x128xf32>
    %2 = tpu.matmul %0, %1, %cst {dimension_numbers = #tpu.dot_dimension_numbers<[1], [0], [0], [1], [0, 0, 1, 1], [], []>} : vector<256x256xbf16>, vector<256x128xbf16>, vector<256x128xf32> -> vector<256x128xf32>
    %c0_3 = arith.constant 0 : index
    %c0_4 = arith.constant 0 : index
    %3 = vector.load %arg4[%c0_3, %c0_4] : memref<1x128xf32, #tpu.memory_space<vmem>>, vector<1x128xf32>
    %4 = vector.broadcast %3 : vector<1x128xf32> to vector<256x128xf32>
    %5 = arith.addf %2, %4 : vector<256x128xf32>
    %cst_5 = arith.constant 0.000000e+00 : f32
    %6 = vector.broadcast %cst_5 : f32 to vector<256x128xf32>
    %7 = arith.maximumf %5, %6 : vector<256x128xf32>
    %8 = arith.truncf %7 : vector<256x128xf32> to vector<256x128xbf16>
    %c0_6 = arith.constant 0 : index
    %c0_7 = arith.constant 0 : index
    %9 = vector.load %arg5[%c0_6, %c0_7] : memref<256x128xbf16, #tpu.memory_space<vmem>>, vector<256x128xbf16>
    tpu.vector_store %arg5[%c0_6, %c0_7], %8 {strides = array<i32>} : memref<256x128xbf16, #tpu.memory_space<vmem>>, vector<256x128xbf16>,
    return
  }
  func.func @transform_0(%arg0: i32, %arg1: i32) -> (i32, i32) {
    %c0_i32 = arith.constant 0 : i32
    %c0_i32_0 = arith.constant 0 : i32
    return %arg0, %c0_i32 : i32, i32
  }
  func.func @transform_1(%arg0: i32, %arg1: i32) -> (i32, i32) {
    %c0_i32 = arith.constant 0 : i32
    %c0_i32_0 = arith.constant 0 : i32
    return %c0_i32, %arg1 : i32, i32
  }
  func.func @transform_2(%arg0: i32, %arg1: i32) -> (i32, i32) {
    %c0_i32 = arith.constant 0 : i32
    %c0_i32_0 = arith.constant 0 : i32
    return %c0_i32, %arg1 : i32, i32
  }
  func.func @transform_3(%arg0: i32, %arg1: i32) -> (i32, i32) {
    %c0_i32 = arith.constant 0 : i32
    return %arg0, %arg1 : i32, i32
  }
}

module attributes {stable_mosaic.version = 11 : i64} {
  func.func @_mm_bias_act_kernel(%arg0: i32, %arg1: i32, %arg2: memref<128x128xbf16, #tpu.memory_space<vmem>>, %arg3: memref<128x128xbf16, #tpu.memory_space<vmem>>, %arg4: memref<1x128xf32, #tpu.memory_space<vmem>>, %arg5: memref<128x128xbf16, #tpu.memory_space<vmem>>) attributes {dimension_semantics = [#tpu.dimension_semantics<parallel>, #tpu.dimension_semantics<parallel>], iteration_bounds = array<i64: 1, 1>, scalar_prefetch = 0 : i64, scratch_operands = 0 : i64, tpu.core_type = #tpu.core_type<tc>, window_params = [{transform_indices = @transform_0, window_bounds = array<i64: 128, 128>}, {transform_indices = @transform_1, window_bounds = array<i64: 128, 128>}, {transform_indices = @transform_2, window_bounds = array<i64: 1, 128>}, {transform_indices = @transform_3, window_bounds = array<i64: 128, 128>}]} {
    %c0 = arith.constant 0 : index
    %c0_0 = arith.constant 0 : index
    %0 = vector.load %arg2[%c0, %c0_0] : memref<128x128xbf16, #tpu.memory_space<vmem>>, vector<128x128xbf16>
    %c0_1 = arith.constant 0 : index
    %c0_2 = arith.constant 0 : index
    %1 = vector.load %arg3[%c0_1, %c0_2] : memref<128x128xbf16, #tpu.memory_space<vmem>>, vector<128x128xbf16>
    %cst = arith.constant dense<0.000000e+00> : vector<128x128xf32>
    %2 = tpu.matmul %0, %1, %cst {dimension_numbers = #tpu.dot_dimension_numbers<[1], [0], [0], [1], [0, 0, 1, 1], [], []>} : vector<128x128xbf16>, vector<128x128xbf16>, vector<128x128xf32> -> vector<128x128xf32>
    %c0_3 = arith.constant 0 : index
    %c0_4 = arith.constant 0 : index
    %3 = vector.load %arg4[%c0_3, %c0_4] : memref<1x128xf32, #tpu.memory_space<vmem>>, vector<1x128xf32>
    %4 = vector.broadcast %3 : vector<1x128xf32> to vector<128x128xf32>
    %5 = arith.addf %2, %4 : vector<128x128xf32>
    %cst_5 = arith.constant 0.000000e+00 : f32
    %6 = vector.broadcast %cst_5 : f32 to vector<128x128xf32>
    %7 = arith.maximumf %5, %6 : vector<128x128xf32>
    %8 = arith.truncf %7 : vector<128x128xf32> to vector<128x128xbf16>
    %c0_6 = arith.constant 0 : index
    %c0_7 = arith.constant 0 : index
    %9 = vector.load %arg5[%c0_6, %c0_7] : memref<128x128xbf16, #tpu.memory_space<vmem>>, vector<128x128xbf16>
    tpu.vector_store %arg5[%c0_6, %c0_7], %8 {strides = array<i32>} : memref<128x128xbf16, #tpu.memory_space<vmem>>, vector<128x128xbf16>,
    return
  }
  func.func @transform_0(%arg0: i32, %arg1: i32) -> (i32, i32) {
    %c0_i32 = arith.constant 0 : i32
    %c0_i32_0 = arith.constant 0 : i32
    return %arg0, %c0_i32 : i32, i32
  }
  func.func @transform_1(%arg0: i32, %arg1: i32) -> (i32, i32) {
    %c0_i32 = arith.constant 0 : i32
    %c0_i32_0 = arith.constant 0 : i32
    return %c0_i32, %arg1 : i32, i32
  }
  func.func @transform_2(%arg0: i32, %arg1: i32) -> (i32, i32) {
    %c0_i32 = arith.constant 0 : i32
    %c0_i32_0 = arith.constant 0 : i32
    return %c0_i32, %arg1 : i32, i32
  }
  func.func @transform_3(%arg0: i32, %arg1: i32) -> (i32, i32) {
    %c0_i32 = arith.constant 0 : i32
    return %arg0, %arg1 : i32, i32
  }
}

module attributes {stable_mosaic.version = 11 : i64} {
  func.func @_mm_bias_act_kernel(%arg0: i32, %arg1: i32, %arg2: memref<128x16xbf16, #tpu.memory_space<vmem>>, %arg3: memref<16x128xbf16, #tpu.memory_space<vmem>>, %arg4: memref<1x128xf32, #tpu.memory_space<vmem>>, %arg5: memref<128x128xbf16, #tpu.memory_space<vmem>>) attributes {dimension_semantics = [#tpu.dimension_semantics<parallel>, #tpu.dimension_semantics<parallel>], iteration_bounds = array<i64: 1, 1>, scalar_prefetch = 0 : i64, scratch_operands = 0 : i64, tpu.core_type = #tpu.core_type<tc>, window_params = [{transform_indices = @transform_0, window_bounds = array<i64: 128, 16>}, {transform_indices = @transform_1, window_bounds = array<i64: 16, 128>}, {transform_indices = @transform_2, window_bounds = array<i64: 1, 128>}, {transform_indices = @transform_3, window_bounds = array<i64: 128, 128>}]} {
    %c0 = arith.constant 0 : index
    %c0_0 = arith.constant 0 : index
    %0 = vector.load %arg2[%c0, %c0_0] : memref<128x16xbf16, #tpu.memory_space<vmem>>, vector<128x16xbf16>
    %c0_1 = arith.constant 0 : index
    %c0_2 = arith.constant 0 : index
    %1 = vector.load %arg3[%c0_1, %c0_2] : memref<16x128xbf16, #tpu.memory_space<vmem>>, vector<16x128xbf16>
    %cst = arith.constant dense<0.000000e+00> : vector<128x128xf32>
    %2 = tpu.matmul %0, %1, %cst {dimension_numbers = #tpu.dot_dimension_numbers<[1], [0], [0], [1], [0, 0, 1, 1], [], []>} : vector<128x16xbf16>, vector<16x128xbf16>, vector<128x128xf32> -> vector<128x128xf32>
    %c0_3 = arith.constant 0 : index
    %c0_4 = arith.constant 0 : index
    %3 = vector.load %arg4[%c0_3, %c0_4] : memref<1x128xf32, #tpu.memory_space<vmem>>, vector<1x128xf32>
    %4 = vector.broadcast %3 : vector<1x128xf32> to vector<128x128xf32>
    %5 = arith.addf %2, %4 : vector<128x128xf32>
    %cst_5 = arith.constant 0.000000e+00 : f32
    %6 = vector.broadcast %cst_5 : f32 to vector<128x128xf32>
    %7 = arith.maximumf %5, %6 : vector<128x128xf32>
    %8 = arith.truncf %7 : vector<128x128xf32> to vector<128x128xbf16>
    %c0_6 = arith.constant 0 : index
    %c0_7 = arith.constant 0 : index
    %9 = vector.load %arg5[%c0_6, %c0_7] : memref<128x128xbf16, #tpu.memory_space<vmem>>, vector<128x128xbf16>
    tpu.vector_store %arg5[%c0_6, %c0_7], %8 {strides = array<i32>} : memref<128x128xbf16, #tpu.memory_space<vmem>>, vector<128x128xbf16>,
    return
  }
  func.func @transform_0(%arg0: i32, %arg1: i32) -> (i32, i32) {
    %c0_i32 = arith.constant 0 : i32
    %c0_i32_0 = arith.constant 0 : i32
    return %arg0, %c0_i32 : i32, i32
  }
  func.func @transform_1(%arg0: i32, %arg1: i32) -> (i32, i32) {
    %c0_i32 = arith.constant 0 : i32
    %c0_i32_0 = arith.constant 0 : i32
    return %c0_i32, %arg1 : i32, i32
  }
  func.func @transform_2(%arg0: i32, %arg1: i32) -> (i32, i32) {
    %c0_i32 = arith.constant 0 : i32
    %c0_i32_0 = arith.constant 0 : i32
    return %c0_i32, %arg1 : i32, i32
  }
  func.func @transform_3(%arg0: i32, %arg1: i32) -> (i32, i32) {
    %c0_i32 = arith.constant 0 : i32
    return %arg0, %arg1 : i32, i32
  }
}

module attributes {stable_mosaic.version = 11 : i64} {
  func.func @_mm_bias_act_kernel(%arg0: i32, %arg1: i32, %arg2: memref<32x256xbf16, #tpu.memory_space<vmem>>, %arg3: memref<256x128xbf16, #tpu.memory_space<vmem>>, %arg4: memref<1x128xf32, #tpu.memory_space<vmem>>, %arg5: memref<32x128xbf16, #tpu.memory_space<vmem>>) attributes {dimension_semantics = [#tpu.dimension_semantics<parallel>, #tpu.dimension_semantics<parallel>], iteration_bounds = array<i64: 1, 1>, scalar_prefetch = 0 : i64, scratch_operands = 0 : i64, tpu.core_type = #tpu.core_type<tc>, window_params = [{transform_indices = @transform_0, window_bounds = array<i64: 32, 256>}, {transform_indices = @transform_1, window_bounds = array<i64: 256, 128>}, {transform_indices = @transform_2, window_bounds = array<i64: 1, 128>}, {transform_indices = @transform_3, window_bounds = array<i64: 32, 128>}]} {
    %c0 = arith.constant 0 : index
    %c0_0 = arith.constant 0 : index
    %0 = vector.load %arg2[%c0, %c0_0] : memref<32x256xbf16, #tpu.memory_space<vmem>>, vector<32x256xbf16>
    %c0_1 = arith.constant 0 : index
    %c0_2 = arith.constant 0 : index
    %1 = vector.load %arg3[%c0_1, %c0_2] : memref<256x128xbf16, #tpu.memory_space<vmem>>, vector<256x128xbf16>
    %cst = arith.constant dense<0.000000e+00> : vector<32x128xf32>
    %2 = tpu.matmul %0, %1, %cst {dimension_numbers = #tpu.dot_dimension_numbers<[1], [0], [0], [1], [0, 0, 1, 1], [], []>} : vector<32x256xbf16>, vector<256x128xbf16>, vector<32x128xf32> -> vector<32x128xf32>
    %c0_3 = arith.constant 0 : index
    %c0_4 = arith.constant 0 : index
    %3 = vector.load %arg4[%c0_3, %c0_4] : memref<1x128xf32, #tpu.memory_space<vmem>>, vector<1x128xf32>
    %4 = vector.broadcast %3 : vector<1x128xf32> to vector<32x128xf32>
    %5 = arith.addf %2, %4 : vector<32x128xf32>
    %cst_5 = arith.constant 0.000000e+00 : f32
    %6 = vector.broadcast %cst_5 : f32 to vector<32x128xf32>
    %7 = arith.maximumf %5, %6 : vector<32x128xf32>
    %8 = arith.truncf %7 : vector<32x128xf32> to vector<32x128xbf16>
    %c0_6 = arith.constant 0 : index
    %c0_7 = arith.constant 0 : index
    %9 = vector.load %arg5[%c0_6, %c0_7] : memref<32x128xbf16, #tpu.memory_space<vmem>>, vector<32x128xbf16>
    tpu.vector_store %arg5[%c0_6, %c0_7], %8 {strides = array<i32>} : memref<32x128xbf16, #tpu.memory_space<vmem>>, vector<32x128xbf16>,
    return
  }
  func.func @transform_0(%arg0: i32, %arg1: i32) -> (i32, i32) {
    %c0_i32 = arith.constant 0 : i32
    %c0_i32_0 = arith.constant 0 : i32
    return %arg0, %c0_i32 : i32, i32
  }
  func.func @transform_1(%arg0: i32, %arg1: i32) -> (i32, i32) {
    %c0_i32 = arith.constant 0 : i32
    %c0_i32_0 = arith.constant 0 : i32
    return %c0_i32, %arg1 : i32, i32
  }
  func.func @transform_2(%arg0: i32, %arg1: i32) -> (i32, i32) {
    %c0_i32 = arith.constant 0 : i32
    %c0_i32_0 = arith.constant 0 : i32
    return %c0_i32, %arg1 : i32, i32
  }
  func.func @transform_3(%arg0: i32, %arg1: i32) -> (i32, i32) {
    %c0_i32 = arith.constant 0 : i32
    return %arg0, %arg1 : i32, i32
  }
}

module attributes {stable_mosaic.version = 11 : i64} {
  func.func @_mm_bias_act_kernel(%arg0: i32, %arg1: i32, %arg2: memref<32x24xbf16, #tpu.memory_space<vmem>>, %arg3: memref<24x128xbf16, #tpu.memory_space<vmem>>, %arg4: memref<1x128xf32, #tpu.memory_space<vmem>>, %arg5: memref<32x128xbf16, #tpu.memory_space<vmem>>) attributes {dimension_semantics = [#tpu.dimension_semantics<parallel>, #tpu.dimension_semantics<parallel>], iteration_bounds = array<i64: 1, 1>, scalar_prefetch = 0 : i64, scratch_operands = 0 : i64, tpu.core_type = #tpu.core_type<tc>, window_params = [{transform_indices = @transform_0, window_bounds = array<i64: 32, 24>}, {transform_indices = @transform_1, window_bounds = array<i64: 24, 128>}, {transform_indices = @transform_2, window_bounds = array<i64: 1, 128>}, {transform_indices = @transform_3, window_bounds = array<i64: 32, 128>}]} {
    %c0 = arith.constant 0 : index
    %c0_0 = arith.constant 0 : index
    %0 = vector.load %arg2[%c0, %c0_0] : memref<32x24xbf16, #tpu.memory_space<vmem>>, vector<32x24xbf16>
    %c0_1 = arith.constant 0 : index
    %c0_2 = arith.constant 0 : index
    %1 = vector.load %arg3[%c0_1, %c0_2] : memref<24x128xbf16, #tpu.memory_space<vmem>>, vector<24x128xbf16>
    %cst = arith.constant dense<0.000000e+00> : vector<32x128xf32>
    %2 = tpu.matmul %0, %1, %cst {dimension_numbers = #tpu.dot_dimension_numbers<[1], [0], [0], [1], [0, 0, 1, 1], [], []>} : vector<32x24xbf16>, vector<24x128xbf16>, vector<32x128xf32> -> vector<32x128xf32>
    %c0_3 = arith.constant 0 : index
    %c0_4 = arith.constant 0 : index
    %3 = vector.load %arg4[%c0_3, %c0_4] : memref<1x128xf32, #tpu.memory_space<vmem>>, vector<1x128xf32>
    %4 = vector.broadcast %3 : vector<1x128xf32> to vector<32x128xf32>
    %5 = arith.addf %2, %4 : vector<32x128xf32>
    %cst_5 = arith.constant 0.000000e+00 : f32
    %6 = vector.broadcast %cst_5 : f32 to vector<32x128xf32>
    %7 = arith.maximumf %5, %6 : vector<32x128xf32>
    %8 = arith.truncf %7 : vector<32x128xf32> to vector<32x128xbf16>
    %c0_6 = arith.constant 0 : index
    %c0_7 = arith.constant 0 : index
    %9 = vector.load %arg5[%c0_6, %c0_7] : memref<32x128xbf16, #tpu.memory_space<vmem>>, vector<32x128xbf16>
    tpu.vector_store %arg5[%c0_6, %c0_7], %8 {strides = array<i32>} : memref<32x128xbf16, #tpu.memory_space<vmem>>, vector<32x128xbf16>,
    return
  }
  func.func @transform_0(%arg0: i32, %arg1: i32) -> (i32, i32) {
    %c0_i32 = arith.constant 0 : i32
    %c0_i32_0 = arith.constant 0 : i32
    return %arg0, %c0_i32 : i32, i32
  }
  func.func @transform_1(%arg0: i32, %arg1: i32) -> (i32, i32) {
    %c0_i32 = arith.constant 0 : i32
    %c0_i32_0 = arith.constant 0 : i32
    return %c0_i32, %arg1 : i32, i32
  }
  func.func @transform_2(%arg0: i32, %arg1: i32) -> (i32, i32) {
    %c0_i32 = arith.constant 0 : i32
    %c0_i32_0 = arith.constant 0 : i32
    return %c0_i32, %arg1 : i32, i32
  }
  func.func @transform_3(%arg0: i32, %arg1: i32) -> (i32, i32) {
    %c0_i32 = arith.constant 0 : i32
    return %arg0, %arg1 : i32, i32
  }
}

module attributes {stable_mosaic.version = 11 : i64} {
  func.func @_mm_bias_act_kernel(%arg0: i32, %arg1: i32, %arg2: memref<8x256xbf16, #tpu.memory_space<vmem>>, %arg3: memref<256x128xbf16, #tpu.memory_space<vmem>>, %arg4: memref<1x128xf32, #tpu.memory_space<vmem>>, %arg5: memref<8x128xbf16, #tpu.memory_space<vmem>>) attributes {dimension_semantics = [#tpu.dimension_semantics<parallel>, #tpu.dimension_semantics<parallel>], iteration_bounds = array<i64: 1, 1>, scalar_prefetch = 0 : i64, scratch_operands = 0 : i64, tpu.core_type = #tpu.core_type<tc>, window_params = [{transform_indices = @transform_0, window_bounds = array<i64: 8, 256>}, {transform_indices = @transform_1, window_bounds = array<i64: 256, 128>}, {transform_indices = @transform_2, window_bounds = array<i64: 1, 128>}, {transform_indices = @transform_3, window_bounds = array<i64: 8, 128>}]} {
    %c0 = arith.constant 0 : index
    %c0_0 = arith.constant 0 : index
    %0 = vector.load %arg2[%c0, %c0_0] : memref<8x256xbf16, #tpu.memory_space<vmem>>, vector<8x256xbf16>
    %c0_1 = arith.constant 0 : index
    %c0_2 = arith.constant 0 : index
    %1 = vector.load %arg3[%c0_1, %c0_2] : memref<256x128xbf16, #tpu.memory_space<vmem>>, vector<256x128xbf16>
    %cst = arith.constant dense<0.000000e+00> : vector<8x128xf32>
    %2 = tpu.matmul %0, %1, %cst {dimension_numbers = #tpu.dot_dimension_numbers<[1], [0], [0], [1], [0, 0, 1, 1], [], []>} : vector<8x256xbf16>, vector<256x128xbf16>, vector<8x128xf32> -> vector<8x128xf32>
    %c0_3 = arith.constant 0 : index
    %c0_4 = arith.constant 0 : index
    %3 = vector.load %arg4[%c0_3, %c0_4] : memref<1x128xf32, #tpu.memory_space<vmem>>, vector<1x128xf32>
    %4 = vector.broadcast %3 : vector<1x128xf32> to vector<8x128xf32>
    %5 = arith.addf %2, %4 : vector<8x128xf32>
    %cst_5 = arith.constant 0.000000e+00 : f32
    %6 = vector.broadcast %cst_5 : f32 to vector<8x128xf32>
    %7 = arith.maximumf %5, %6 : vector<8x128xf32>
    %8 = arith.truncf %7 : vector<8x128xf32> to vector<8x128xbf16>
    %c0_6 = arith.constant 0 : index
    %c0_7 = arith.constant 0 : index
    %9 = vector.load %arg5[%c0_6, %c0_7] : memref<8x128xbf16, #tpu.memory_space<vmem>>, vector<8x128xbf16>
    tpu.vector_store %arg5[%c0_6, %c0_7], %8 {strides = array<i32>} : memref<8x128xbf16, #tpu.memory_space<vmem>>, vector<8x128xbf16>,
    return
  }
  func.func @transform_0(%arg0: i32, %arg1: i32) -> (i32, i32) {
    %c0_i32 = arith.constant 0 : i32
    %c0_i32_0 = arith.constant 0 : i32
    return %arg0, %c0_i32 : i32, i32
  }
  func.func @transform_1(%arg0: i32, %arg1: i32) -> (i32, i32) {
    %c0_i32 = arith.constant 0 : i32
    %c0_i32_0 = arith.constant 0 : i32
    return %c0_i32, %arg1 : i32, i32
  }
  func.func @transform_2(%arg0: i32, %arg1: i32) -> (i32, i32) {
    %c0_i32 = arith.constant 0 : i32
    %c0_i32_0 = arith.constant 0 : i32
    return %c0_i32, %arg1 : i32, i32
  }
  func.func @transform_3(%arg0: i32, %arg1: i32) -> (i32, i32) {
    %c0_i32 = arith.constant 0 : i32
    return %arg0, %arg1 : i32, i32
  }
}

module attributes {stable_mosaic.version = 11 : i64} {
  func.func @_mm_bias_act_kernel(%arg0: i32, %arg1: i32, %arg2: memref<8x32xbf16, #tpu.memory_space<vmem>>, %arg3: memref<32x128xbf16, #tpu.memory_space<vmem>>, %arg4: memref<1x128xf32, #tpu.memory_space<vmem>>, %arg5: memref<8x128xbf16, #tpu.memory_space<vmem>>) attributes {dimension_semantics = [#tpu.dimension_semantics<parallel>, #tpu.dimension_semantics<parallel>], iteration_bounds = array<i64: 1, 1>, scalar_prefetch = 0 : i64, scratch_operands = 0 : i64, tpu.core_type = #tpu.core_type<tc>, window_params = [{transform_indices = @transform_0, window_bounds = array<i64: 8, 32>}, {transform_indices = @transform_1, window_bounds = array<i64: 32, 128>}, {transform_indices = @transform_2, window_bounds = array<i64: 1, 128>}, {transform_indices = @transform_3, window_bounds = array<i64: 8, 128>}]} {
    %c0 = arith.constant 0 : index
    %c0_0 = arith.constant 0 : index
    %0 = vector.load %arg2[%c0, %c0_0] : memref<8x32xbf16, #tpu.memory_space<vmem>>, vector<8x32xbf16>
    %c0_1 = arith.constant 0 : index
    %c0_2 = arith.constant 0 : index
    %1 = vector.load %arg3[%c0_1, %c0_2] : memref<32x128xbf16, #tpu.memory_space<vmem>>, vector<32x128xbf16>
    %cst = arith.constant dense<0.000000e+00> : vector<8x128xf32>
    %2 = tpu.matmul %0, %1, %cst {dimension_numbers = #tpu.dot_dimension_numbers<[1], [0], [0], [1], [0, 0, 1, 1], [], []>} : vector<8x32xbf16>, vector<32x128xbf16>, vector<8x128xf32> -> vector<8x128xf32>
    %c0_3 = arith.constant 0 : index
    %c0_4 = arith.constant 0 : index
    %3 = vector.load %arg4[%c0_3, %c0_4] : memref<1x128xf32, #tpu.memory_space<vmem>>, vector<1x128xf32>
    %4 = vector.broadcast %3 : vector<1x128xf32> to vector<8x128xf32>
    %5 = arith.addf %2, %4 : vector<8x128xf32>
    %cst_5 = arith.constant 0.000000e+00 : f32
    %6 = vector.broadcast %cst_5 : f32 to vector<8x128xf32>
    %7 = arith.maximumf %5, %6 : vector<8x128xf32>
    %8 = arith.truncf %7 : vector<8x128xf32> to vector<8x128xbf16>
    %c0_6 = arith.constant 0 : index
    %c0_7 = arith.constant 0 : index
    %9 = vector.load %arg5[%c0_6, %c0_7] : memref<8x128xbf16, #tpu.memory_space<vmem>>, vector<8x128xbf16>
    tpu.vector_store %arg5[%c0_6, %c0_7], %8 {strides = array<i32>} : memref<8x128xbf16, #tpu.memory_space<vmem>>, vector<8x128xbf16>,
    return
  }
  func.func @transform_0(%arg0: i32, %arg1: i32) -> (i32, i32) {
    %c0_i32 = arith.constant 0 : i32
    %c0_i32_0 = arith.constant 0 : i32
    return %arg0, %c0_i32 : i32, i32
  }
  func.func @transform_1(%arg0: i32, %arg1: i32) -> (i32, i32) {
    %c0_i32 = arith.constant 0 : i32
    %c0_i32_0 = arith.constant 0 : i32
    return %c0_i32, %arg1 : i32, i32
  }
  func.func @transform_2(%arg0: i32, %arg1: i32) -> (i32, i32) {
    %c0_i32 = arith.constant 0 : i32
    %c0_i32_0 = arith.constant 0 : i32
    return %c0_i32, %arg1 : i32, i32
  }
  func.func @transform_3(%arg0: i32, %arg1: i32) -> (i32, i32) {
    %c0_i32 = arith.constant 0 : i32
    return %arg0, %arg1 : i32, i32
  }
}

</mosaic_0001>

<llo_original>
// kernel: osnet_forward.7
$region0: #{osnet_forward.7}
  #allocation0 [shape = 'u32[]', space=smem, size = 0x4, offset = 0x4, fixed_abs, tag = 'smem constant byte address 0x4 - core index']
  #allocation1 [shape = 'u32[144,128]{1,0:T(1,128)}', space=vmem, size = 0x12000, scoped, tag = 'internal scratch']
  %s0 = inlined_call_operand.vmem [shape: bf16[512,256], index: 0, kind: input, shape index: {}]
  %s1 = inlined_call_operand.vmem [shape: bf16[256,128], index: 1, kind: input, shape index: {}]
  %s2 = inlined_call_operand.vmem [shape: f32[1,128], index: 2, kind: input, shape index: {}]
  %s3 = inlined_call_operand.vmem [shape: bf16[512,128], index: 3, kind: output, shape index: {}]
  %s4 = sld [smem:[#allocation0]]
  $region45: #{osnet_forward.7} parent=0
    _
  %s6 = ssub.s32 1, %s4
  %s7 = scalar_select 0, %s6, %s4
  loop: start=0, step=1, limit=4
  $region2: #{osnet_forward.7} parent=0 // loop_pre_header
    _
  $region3: #{osnet_forward.7} parent=0 // loop_header
    %s9 = sphi 0, %s13
    %p10 = scmp.ge.s32.totalorder %s9, 4
    %s16 = sphi 0, %s28
    %s17 = sphi 0, %s24
    %s18 = sphi 0, %s16
    %s19 = sphi 0, %s17
    %s20 = sphi 0, %s18
    %s21 = sphi 0, %s19
    %s31 = sphi 0, %s33
    %s34 = sphi 0, %s31
    %s35 = sphi 0, %s34
    %s51 = sphi 0, %s35
    %s57 = sphi 0, %s59
    %s60 = sphi 0, %s57
    %s61 = sphi 0, %s60
    %s77 = sphi 0, %s61
    %s83 = sphi 0, %s85
    %s86 = sphi 0, %s83
    %s87 = sphi 0, %s86
    %s103 = sphi 0, %s87
    %s111 = sphi 0, %s113
    %s114 = sphi 0, %s111
    %s115 = sphi 0, %s114
    %s131 = sphi 0, %s115
  $region4: #{osnet_forward.7} parent=0 // loop_header_branch
    %12 = sbr.rel (%p10) target = $region8
  $region5: #{osnet_forward.7} parent=0 // loop_body
    %s14 = ssub.s32 %s9, 1
    %s15 = ssub.s32 %s9, 2
    %s22 = sadd.s32 1, %s17
    %p23 = scmp.ge.s32.totalorder %s22, 1
    %s24 = scalar_select %p23, 0, %s22
    %s25 = sadd.s32 1, %s16
    %s26 = scalar_select %p23, %s25, %s16
    %p27 = scmp.ge.s32.totalorder %s26, 2
    %s28 = scalar_select %p27, 0, %s26
    %s29 = ssub.s32 %s16, %s28
    %p30 = scmp.eq.s32.totalorder %s29, 0
    %s32 = sadd.s32 %s31, 1
    %s33 = scalar_select %p30, %s31, %s32
    %p36 = pneg %p30
    %p37 = scmp.eq.s32.totalorder %s9, 1
    %p38 = por %p36, %p37
    %p39 = scmp.ne.s32.totalorder %s31, %s34
    %p40 = scmp.eq.s32.totalorder %s9, 0
    %p41 = por %p39, %p40
    %p42 = scmp.ne.s32.totalorder %s31, %s34
    %p43 = scmp.eq.s32.totalorder %s14, 1
    %p44 = por %p42, %p43
    %p45 = scmp.ne.s32.totalorder %s34, %s35
    %p46 = scmp.eq.s32.totalorder %s14, 0
    %p47 = por %p45, %p46
    %p48 = scmp.ne.s32.totalorder %s34, %s35
    %p49 = scmp.eq.s32.totalorder %s15, 1
    %p50 = por %p48, %p49
    %p52 = scmp.ne.s32.totalorder %s35, %s51
    %p53 = scmp.eq.s32.totalorder %s15, 0
    %p54 = por %p52, %p53
    %s55 = ssub.s32 %s17, %s24
    %p56 = scmp.eq.s32.totalorder %s55, 0
    %s58 = sadd.s32 %s57, 1
    %s59 = scalar_select %p56, %s57, %s58
    %p62 = pneg %p56
    %p63 = scmp.eq.s32.totalorder %s9, 1
    %p64 = por %p62, %p63
    %p65 = scmp.ne.s32.totalorder %s57, %s60
    %p66 = scmp.eq.s32.totalorder %s9, 0
    %p67 = por %p65, %p66
    %p68 = scmp.ne.s32.totalorder %s57, %s60
    %p69 = scmp.eq.s32.totalorder %s14, 1
    %p70 = por %p68, %p69
    %p71 = scmp.ne.s32.totalorder %s60, %s61
    %p72 = scmp.eq.s32.totalorder %s14, 0
    %p73 = por %p71, %p72
    %p74 = scmp.ne.s32.totalorder %s60, %s61
    %p75 = scmp.eq.s32.totalorder %s15, 1
    %p76 = por %p74, %p75
    %p78 = scmp.ne.s32.totalorder %s61, %s77
    %p79 = scmp.eq.s32.totalorder %s15, 0
    %p80 = por %p78, %p79
    %s81 = ssub.s32 %s17, %s24
    %p82 = scmp.eq.s32.totalorder %s81, 0
    %s84 = sadd.s32 %s83, 1
    %s85 = scalar_select %p82, %s83, %s84
    %p88 = pneg %p82
    %p89 = scmp.eq.s32.totalorder %s9, 1
    %p90 = por %p88, %p89
    %p91 = scmp.ne.s32.totalorder %s83, %s86
    %p92 = scmp.eq.s32.totalorder %s9, 0
    %p93 = por %p91, %p92
    %p94 = scmp.ne.s32.totalorder %s83, %s86
    %p95 = scmp.eq.s32.totalorder %s14, 1
    %p96 = por %p94, %p95
    %p97 = scmp.ne.s32.totalorder %s86, %s87
    %p98 = scmp.eq.s32.totalorder %s14, 0
    %p99 = por %p97, %p98
    %p100 = scmp.ne.s32.totalorder %s86, %s87
    %p101 = scmp.eq.s32.totalorder %s15, 1
    %p102 = por %p100, %p101
    %p104 = scmp.ne.s32.totalorder %s87, %s103
    %p105 = scmp.eq.s32.totalorder %s15, 0
    %p106 = por %p104, %p105
    %s107 = ssub.s32 %s16, %s28
    %s108 = ssub.s32 %s17, %s24
    %s109 = sor.u32 %s107, %s108
    %p110 = scmp.eq.s32.totalorder %s109, 0
    %s112 = sadd.s32 %s111, 1
    %s113 = scalar_select %p110, %s111, %s112
    %p116 = pneg %p110
    %p117 = scmp.eq.s32.totalorder %s9, 1
    %p118 = por %p116, %p117
    %p119 = scmp.ne.s32.totalorder %s111, %s114
    %p120 = scmp.eq.s32.totalorder %s9, 0
    %p121 = por %p119, %p120
    %p122 = scmp.ne.s32.totalorder %s111, %s114
    %p123 = scmp.eq.s32.totalorder %s14, 1
    %p124 = por %p122, %p123
    %p125 = scmp.ne.s32.totalorder %s114, %s115
    %p126 = scmp.eq.s32.totalorder %s14, 0
    %p127 = por %p125, %p126
    %p128 = scmp.ne.s32.totalorder %s114, %s115
    %p129 = scmp.eq.s32.totalorder %s15, 1
    %p130 = por %p128, %p129
    %p132 = scmp.ne.s32.totalorder %s115, %s131
    %p133 = scmp.eq.s32.totalorder %s15, 0
    %p134 = por %p132, %p133
    %p135 = scmp.le.s32.totalorder 1, %s9
    %p136 = scmp.lt.s32.totalorder %s9, 3
    %p137 = pnand %p135, %p136
    %p138 = pneg %p137
    // Predicated region
    $region9: #{osnet_forward.7} parent=5 // pred_check
      _
    $region10: #{osnet_forward.7} parent=5 // pred_check_branch
      %140 = sbr.rel (%p137) target = $region12
    $region11: #{osnet_forward.7} parent=5 // pred_region
      %s141 = ssub.s32 %s9, 1
      // Predicated region
      $region13: #{osnet_forward.7} parent=11 // pred_check
        %p142 = pneg %p73
      $region14: #{osnet_forward.7} parent=11 // pred_check_branch
        %144 = sbr.rel (%p142) target = $region16
      $region15: #{osnet_forward.7} parent=11 // pred_region
        %p145 = scmp.lt.s32.totalorder %s19, 0
        %s146 = scalar_select %p145, %s19, 0
        %s147 = smul.addr %s146, 4
        %s148 = scalar_lea.vmem %s1, %s147
      $region16: #{osnet_forward.7} parent=11 // pred_fallthru
        _
      // Predicated region
      $region17: #{osnet_forward.7} parent=11 // pred_check
        %p149 = pneg %p99
      $region18: #{osnet_forward.7} parent=11 // pred_check_branch
        %151 = sbr.rel (%p149) target = $region20
      $region19: #{osnet_forward.7} parent=11 // pred_region
        %p152 = scmp.lt.s32.totalorder %s19, 0
        %s153 = scalar_select %p152, %s19, 0
        %s154 = scalar_lea.vmem %s2, %s153
      $region20: #{osnet_forward.7} parent=11 // pred_fallthru
        _
    $region12: #{osnet_forward.7} parent=5 // pred_fallthru
      _
    %p155 = scmp.lt.s32.totalorder %s9, 2
    // Predicated region
    $region21: #{osnet_forward.7} parent=5 // pred_check
      %p156 = pneg %p155
    $region22: #{osnet_forward.7} parent=5 // pred_check_branch
      %158 = sbr.rel (%p156) target = $region24
    $region23: #{osnet_forward.7} parent=5 // pred_region
      // Predicated region
      $region25: #{osnet_forward.7} parent=23 // pred_check
        %p159 = pneg %p41
      $region26: #{osnet_forward.7} parent=23 // pred_check_branch
        %161 = sbr.rel (%p159) target = $region28
      $region27: #{osnet_forward.7} parent=23 // pred_region
        %s162 = smul.u32 32, %s16
        %p163 = scmp.lt.s32.totalorder %s162, 63
        %s164 = scalar_select %p163, %s162, 63
        %s165 = smul.addr %s164, 2
        %s166 = smul.addr %s165, 4
        %s167 = scalar_lea.vmem %s0, %s166
        %s168 = smul.u32 32, %s16
      $region28: #{osnet_forward.7} parent=23 // pred_fallthru
        _
    $region24: #{osnet_forward.7} parent=5 // pred_fallthru
      _
    %p169 = scmp.le.s32.totalorder 1, %s9
    %p170 = scmp.lt.s32.totalorder %s9, 3
    %p171 = pnand %p169, %p170
    %p172 = pneg %p171
    // Predicated region
    $region29: #{osnet_forward.7} parent=5 // pred_check
      _
    $region30: #{osnet_forward.7} parent=5 // pred_check_branch
      %174 = sbr.rel (%p171) target = $region32
    $region31: #{osnet_forward.7} parent=5 // pred_region
      %s175 = ssub.s32 %s9, 1
      %s176 = smul.u32 32, %s18
      %p177 = scmp.lt.s32.totalorder %s176, 63
      %s178 = scalar_select %p177, %s176, 63
      %s179 = smul.addr %s178, 2
      %s180 = smul.addr %s179, 4
      %s181 = scalar_lea.vmem %s0, %s180
      %p182 = pneg %p47
      %p183 = pneg %p44
      %p184 = scmp.lt.s32.totalorder %s19, 0
      %s185 = scalar_select %p184, %s19, 0
      %s186 = smul.addr %s185, 4
      %s187 = scalar_lea.vmem %s1, %s186
      %p188 = pneg %p73
      %p189 = pneg %p70
      %p190 = scmp.lt.s32.totalorder %s19, 0
      %s191 = scalar_select %p190, %s19, 0
      %s192 = scalar_lea.vmem %s2, %s191
      %p193 = pneg %p99
      %p194 = pneg %p96
      %p195 = pneg %p127
      %p196 = pneg %p124
      %s197 = smul.u32 32, %s18
      %p198 = scmp.lt.s32.totalorder %s197, 63
      %s199 = scalar_select %p198, %s197, 63
      %p200 = scmp.lt.s32.totalorder %s19, 0
      %s201 = scalar_select %p200, %s19, 0
      %s202 = sadd.s32 %s201, %s199
      %s203 = smul.addr %s202, 4
      %s204 = scalar_lea.vmem %s3, %s203
      %s205 = smul.u32 32, %s18
      %p206 = scmp.lt.s32.totalorder %s205, 63
      %s207 = scalar_select %p206, %s205, 63
      %s208 = smul.addr %s207, 2
      %s209 = smul.addr %s208, 4
      %s210 = scalar_lea.vmem %s0, %s209
      %s211 = smul.u32 32, %s18
      %p212 = scmp.lt.s32.totalorder %s19, 0
      %s213 = scalar_select %p212, %s19, 0
      %s214 = smul.addr %s213, 4
      %s215 = scalar_lea.vmem %s1, %s214
      %p216 = scmp.lt.s32.totalorder %s19, 0
      %s217 = scalar_select %p216, %s19, 0
      %s218 = scalar_lea.vmem %s2, %s217
      %s219 = smul.u32 32, %s18
      %p220 = scmp.lt.s32.totalorder %s219, 63
      %s221 = scalar_select %p220, %s219, 63
      %p222 = scmp.lt.s32.totalorder %s19, 0
      %s223 = scalar_select %p222, %s19, 0
      %s224 = sadd.s32 %s223, %s221
      %s225 = smul.addr %s224, 4
      %s226 = scalar_lea.vmem %s3, %s225
      %s227 = smul.u32 32, %s18
      %v229 = vld [vmem:[%s210] sm:$0xff]
      %v230 = vld [vmem:[%s210 + $0x8] sm:$0xff]
      %v231 = vld [vmem:[%s210 + $0x10] sm:$0xff]
      %v232 = vld [vmem:[%s210 + $0x18] sm:$0xff]
      %v233 = vld [vmem:[%s210 + $0x20] sm:$0xff]
      %v234 = vld [vmem:[%s210 + $0x28] sm:$0xff]
      %v235 = vld [vmem:[%s210 + $0x30] sm:$0xff]
      %v236 = vld [vmem:[%s210 + $0x38] sm:$0xff]
      %v237 = vld [vmem:[%s210 + $0x40] sm:$0xff]
      %v238 = vld [vmem:[%s210 + $0x48] sm:$0xff]
      %v239 = vld [vmem:[%s210 + $0x50] sm:$0xff]
      %v240 = vld [vmem:[%s210 + $0x58] sm:$0xff]
      %v241 = vld [vmem:[%s210 + $0x60] sm:$0xff]
      %v242 = vld [vmem:[%s210 + $0x68] sm:$0xff]
      %v243 = vld [vmem:[%s210 + $0x70] sm:$0xff]
      %v244 = vld [vmem:[%s210 + $0x78] sm:$0xff]
      %v245 = vld [vmem:[%s210 + $0x80] sm:$0xff]
      %v246 = vld [vmem:[%s210 + $0x88] sm:$0xff]
      %v247 = vld [vmem:[%s210 + $0x90] sm:$0xff]
      %v248 = vld [vmem:[%s210 + $0x98] sm:$0xff]
      %v249 = vld [vmem:[%s210 + $0xa0] sm:$0xff]
      %v250 = vld [vmem:[%s210 + $0xa8] sm:$0xff]
      %v251 = vld [vmem:[%s210 + $0xb0] sm:$0xff]
      %v252 = vld [vmem:[%s210 + $0xb8] sm:$0xff]
      %v253 = vld [vmem:[%s210 + $0xc0] sm:$0xff]
      %v254 = vld [vmem:[%s210 + $0xc8] sm:$0xff]
      %v255 = vld [vmem:[%s210 + $0xd0] sm:$0xff]
      %v256 = vld [vmem:[%s210 + $0xd8] sm:$0xff]
      %v257 = vld [vmem:[%s210 + $0xe0] sm:$0xff]
      %v258 = vld [vmem:[%s210 + $0xe8] sm:$0xff]
      %v259 = vld [vmem:[%s210 + $0xf0] sm:$0xff]
      %v260 = vld [vmem:[%s210 + $0xf8] sm:$0xff]
      %v261 = vld [vmem:[%s215] sm:$0xf]
      %v262 = vld [vmem:[%s215 + $0x4] sm:$0xf]
      %v263 = vld [vmem:[%s215 + $0x8] sm:$0xf]
      %v264 = vld [vmem:[%s215 + $0xc] sm:$0xf]
      %v265 = vld [vmem:[%s215 + $0x10] sm:$0xf]
      %v266 = vld [vmem:[%s215 + $0x14] sm:$0xf]
      %v267 = vld [vmem:[%s215 + $0x18] sm:$0xf]
      %v268 = vld [vmem:[%s215 + $0x1c] sm:$0xf]
      %v269 = vld [vmem:[%s215 + $0x20] sm:$0xf]
      %v270 = vld [vmem:[%s215 + $0x24] sm:$0xf]
      %v271 = vld [vmem:[%s215 + $0x28] sm:$0xf]
      %v272 = vld [vmem:[%s215 + $0x2c] sm:$0xf]
      %v273 = vld [vmem:[%s215 + $0x30] sm:$0xf]
      %v274 = vld [vmem:[%s215 + $0x34] sm:$0xf]
      %v275 = vld [vmem:[%s215 + $0x38] sm:$0xf]
      %v276 = vld [vmem:[%s215 + $0x3c] sm:$0xf]
      %v277 = vld [vmem:[%s215 + $0x40] sm:$0xf]
      %v278 = vld [vmem:[%s215 + $0x44] sm:$0xf]
      %v279 = vld [vmem:[%s215 + $0x48] sm:$0xf]
      %v280 = vld [vmem:[%s215 + $0x4c] sm:$0xf]
      %v281 = vld [vmem:[%s215 + $0x50] sm:$0xf]
      %v282 = vld [vmem:[%s215 + $0x54] sm:$0xf]
      %v283 = vld [vmem:[%s215 + $0x58] sm:$0xf]
      %v284 = vld [vmem:[%s215 + $0x5c] sm:$0xf]
      %v285 = vld [vmem:[%s215 + $0x60] sm:$0xf]
      %v286 = vld [vmem:[%s215 + $0x64] sm:$0xf]
      %v287 = vld [vmem:[%s215 + $0x68] sm:$0xf]
      %v288 = vld [vmem:[%s215 + $0x6c] sm:$0xf]
      %v289 = vld [vmem:[%s215 + $0x70] sm:$0xf]
      %v290 = vld [vmem:[%s215 + $0x74] sm:$0xf]
      %v291 = vld [vmem:[%s215 + $0x78] sm:$0xf]
      %v292 = vld [vmem:[%s215 + $0x7c] sm:$0xf]
      %v293 = vld [vmem:[%s218] sm:$0x1]
      %v295 = vlaneseq
      %v296 = vshrl.u32 %v295, 7
      %v297 = vsub.s32 0, %v296
      %v298 = vrot.slane %v293, %v297
      %v332 = vunpack.c.l.b16 %v229
      %v333 = vunpack.c.h.b16 %v229
      %v334 = vunpack.c.l.b16 %v230
      %v335 = vunpack.c.h.b16 %v230
      %v336 = vunpack.c.l.b16 %v231
      %v337 = vunpack.c.h.b16 %v231
      %v338 = vunpack.c.l.b16 %v232
      %v339 = vunpack.c.h.b16 %v232
      %v340 = vunpack.c.l.b16 %v233
      %v341 = vunpack.c.h.b16 %v233
      %v342 = vunpack.c.l.b16 %v234
      %v343 = vunpack.c.h.b16 %v234
      %v344 = vunpack.c.l.b16 %v235
      %v345 = vunpack.c.h.b16 %v235
      %v346 = vunpack.c.l.b16 %v236
      %v347 = vunpack.c.h.b16 %v236
      %v348 = vunpack.c.l.b16 %v237
      %v349 = vunpack.c.h.b16 %v237
      %v350 = vunpack.c.l.b16 %v238
      %v351 = vunpack.c.h.b16 %v238
      %v352 = vunpack.c.l.b16 %v239
      %v353 = vunpack.c.h.b16 %v239
      %v354 = vunpack.c.l.b16 %v240
      %v355 = vunpack.c.h.b16 %v240
      %v356 = vunpack.c.l.b16 %v241
      %v357 = vunpack.c.h.b16 %v241
      %v358 = vunpack.c.l.b16 %v242
      %v359 = vunpack.c.h.b16 %v242
      %v360 = vunpack.c.l.b16 %v243
      %v361 = vunpack.c.h.b16 %v243
      %v362 = vunpack.c.l.b16 %v244
      %v363 = vunpack.c.h.b16 %v244
      %v364 = vunpack.c.l.b16 %v245
      %v365 = vunpack.c.h.b16 %v245
      %v366 = vunpack.c.l.b16 %v246
      %v367 = vunpack.c.h.b16 %v246
      %v368 = vunpack.c.l.b16 %v247
      %v369 = vunpack.c.h.b16 %v247
      %v370 = vunpack.c.l.b16 %v248
      %v371 = vunpack.c.h.b16 %v248
      %v372 = vunpack.c.l.b16 %v249
      %v373 = vunpack.c.h.b16 %v249
      %v374 = vunpack.c.l.b16 %v250
      %v375 = vunpack.c.h.b16 %v250
      %v376 = vunpack.c.l.b16 %v251
      %v377 = vunpack.c.h.b16 %v251
      %v378 = vunpack.c.l.b16 %v252
      %v379 = vunpack.c.h.b16 %v252
      %v380 = vunpack.c.l.b16 %v253
      %v381 = vunpack.c.h.b16 %v253
      %v382 = vunpack.c.l.b16 %v254
      %v383 = vunpack.c.h.b16 %v254
      %v384 = vunpack.c.l.b16 %v255
      %v385 = vunpack.c.h.b16 %v255
      %v386 = vunpack.c.l.b16 %v256
      %v387 = vunpack.c.h.b16 %v256
      %v388 = vunpack.c.l.b16 %v257
      %v389 = vunpack.c.h.b16 %v257
      %v390 = vunpack.c.l.b16 %v258
      %v391 = vunpack.c.h.b16 %v258
      %v392 = vunpack.c.l.b16 %v259
      %v393 = vunpack.c.h.b16 %v259
      %v394 = vunpack.c.l.b16 %v260
      %v395 = vunpack.c.h.b16 %v260
      %v396 = vpack.c.b16 %v334, %v332
      %v397 = vpack.c.b16 %v335, %v333
      %v398 = vpack.c.b16 %v338, %v336
      %v399 = vpack.c.b16 %v339, %v337
      %v400 = vpack.c.b16 %v342, %v340
      %v401 = vpack.c.b16 %v343, %v341
      %v402 = vpack.c.b16 %v346, %v344
      %v403 = vpack.c.b16 %v347, %v345
      %v404 = vpack.c.b16 %v350, %v348
      %v405 = vpack.c.b16 %v351, %v349
      %v406 = vpack.c.b16 %v354, %v352
      %v407 = vpack.c.b16 %v355, %v353
      %v408 = vpack.c.b16 %v358, %v356
      %v409 = vpack.c.b16 %v359, %v357
      %v410 = vpack.c.b16 %v362, %v360
      %v411 = vpack.c.b16 %v363, %v361
      %v412 = vpack.c.b16 %v366, %v364
      %v413 = vpack.c.b16 %v367, %v365
      %v414 = vpack.c.b16 %v370, %v368
      %v415 = vpack.c.b16 %v371, %v369
      %v416 = vpack.c.b16 %v374, %v372
      %v417 = vpack.c.b16 %v375, %v373
      %v418 = vpack.c.b16 %v378, %v376
      %v419 = vpack.c.b16 %v379, %v377
      %v420 = vpack.c.b16 %v382, %v380
      %v421 = vpack.c.b16 %v383, %v381
      %v422 = vpack.c.b16 %v386, %v384
      %v423 = vpack.c.b16 %v387, %v385
      %v424 = vpack.c.b16 %v390, %v388
      %v425 = vpack.c.b16 %v391, %v389
      %v426 = vpack.c.b16 %v394, %v392
      %v427 = vpack.c.b16 %v395, %v393
      %v492 = vunpack.c.l.b16 %v261
      %v493 = vunpack.c.l.b16 %v262
      %v494 = vunpack.c.l.b16 %v263
      %v495 = vunpack.c.l.b16 %v264
      %v496 = vunpack.c.l.b16 %v265
      %v497 = vunpack.c.l.b16 %v266
      %v498 = vunpack.c.l.b16 %v267
      %v499 = vunpack.c.l.b16 %v268
      %v500 = vunpack.c.l.b16 %v269
      %v501 = vunpack.c.l.b16 %v270
      %v502 = vunpack.c.l.b16 %v271
      %v503 = vunpack.c.l.b16 %v272
      %v504 = vunpack.c.l.b16 %v273
      %v505 = vunpack.c.l.b16 %v274
      %v506 = vunpack.c.l.b16 %v275
      %v507 = vunpack.c.l.b16 %v276
      %v508 = vunpack.c.l.b16 %v277
      %v509 = vunpack.c.l.b16 %v278
      %v510 = vunpack.c.l.b16 %v279
      %v511 = vunpack.c.l.b16 %v280
      %v512 = vunpack.c.l.b16 %v281
      %v513 = vunpack.c.l.b16 %v282
      %v514 = vunpack.c.l.b16 %v283
      %v515 = vunpack.c.l.b16 %v284
      %v516 = vunpack.c.l.b16 %v285
      %v517 = vunpack.c.l.b16 %v286
      %v518 = vunpack.c.l.b16 %v287
      %v519 = vunpack.c.l.b16 %v288
      %v520 = vunpack.c.l.b16 %v289
      %v521 = vunpack.c.l.b16 %v290
      %v522 = vunpack.c.l.b16 %v291
      %v523 = vunpack.c.l.b16 %v292
      %v524 = vpack.c.b16 %v493, %v492
      %v525 = vpack.c.b16 %v495, %v494
      %v526 = vpack.c.b16 %v497, %v496
      %v527 = vpack.c.b16 %v499, %v498
      %v528 = vpack.c.b16 %v501, %v500
      %v529 = vpack.c.b16 %v503, %v502
      %v530 = vpack.c.b16 %v505, %v504
      %v531 = vpack.c.b16 %v507, %v506
      %v532 = vpack.c.b16 %v509, %v508
      %v533 = vpack.c.b16 %v511, %v510
      %v534 = vpack.c.b16 %v513, %v512
      %v535 = vpack.c.b16 %v515, %v514
      %v536 = vpack.c.b16 %v517, %v516
      %v537 = vpack.c.b16 %v519, %v518
      %v538 = vpack.c.b16 %v521, %v520
      %v539 = vpack.c.b16 %v523, %v522
      %556 = vmatprep.subr.bf16.mxu0 0
      %557 = vmatpush1.bf16.msra.mxu0 %v524
      %558 = vmatprep.subr.bf16.mxu0 0
      %559 = vmatpush1.bf16.msra.mxu0 %v525
      %560 = vmatprep.subr.bf16.mxu0 0
      %561 = vmatpush1.bf16.msra.mxu0 %v526
      %562 = vmatprep.subr.bf16.mxu0 0
      %563 = vmatpush1.bf16.msra.mxu0 %v527
      %564 = vmatprep.subr.bf16.mxu0 0
      %565 = vmatpush1.bf16.msra.mxu0 %v528
      %566 = vmatprep.subr.bf16.mxu0 0
      %567 = vmatpush1.bf16.msra.mxu0 %v529
      %568 = vmatprep.subr.bf16.mxu0 0
      %569 = vmatpush1.bf16.msra.mxu0 %v530
      %570 = vmatprep.subr.bf16.mxu0 0
      %571 = vmatpush1.bf16.msra.mxu0 %v531
      %572 = vmatprep.subr.bf16.mxu0 0
      %573 = vmatpush1.bf16.msra.mxu0 %v532
      %574 = vmatprep.subr.bf16.mxu0 0
      %575 = vmatpush1.bf16.msra.mxu0 %v533
      %576 = vmatprep.subr.bf16.mxu0 0
      %577 = vmatpush1.bf16.msra.mxu0 %v534
      %578 = vmatprep.subr.bf16.mxu0 0
      %579 = vmatpush1.bf16.msra.mxu0 %v535
      %580 = vmatprep.subr.bf16.mxu0 0
      %581 = vmatpush1.bf16.msra.mxu0 %v536
      %582 = vmatprep.subr.bf16.mxu0 0
      %583 = vmatpush1.bf16.msra.mxu0 %v537
      %584 = vmatprep.subr.bf16.mxu0 0
      %585 = vmatpush1.bf16.msra.mxu0 %v538
      %586 = vmatprep.subr.bf16.mxu0 0
      %587 = vmatpush1.bf16.msra.mxu0 %v539
      %588 = vmatprep.mubr.bf16.mxu0 %v397
      %589 = vmatmul.mubr.bf16.gmra.mrb[0].mxu0 %v396
      %v590 = vpop.f32.mrb[0].mxu0
      %v591 = vadd.f32 %v298, %v590
      %v592 = vpop.f32.mrb[0].mxu0
      %v593 = vpop.f32.mrb[0].mxu0
      %v594 = vadd.f32 %v298, %v593
      %v595 = vpop.f32.mrb[0].mxu0
      %596 = vmatprep.mubr.bf16.mxu0 %v399
      %597 = vmatmul.mubr.bf16.gmra.mrb[0].mxu0 %v398
      %v598 = vpop.f32.mrb[0].mxu0
      %v599 = vadd.f32 %v298, %v598
      %v600 = vpop.f32.mrb[0].mxu0
      %v601 = vpop.f32.mrb[0].mxu0
      %v602 = vadd.f32 %v298, %v601
      %v603 = vpop.f32.mrb[0].mxu0
      %604 = vmatprep.mubr.bf16.mxu0 %v401
      %605 = vmatmul.mubr.bf16.gmra.mrb[0].mxu0 %v400
      %v606 = vpop.f32.mrb[0].mxu0
      %v607 = vadd.f32 %v298, %v606
      %v608 = vpop.f32.mrb[0].mxu0
      %v609 = vpop.f32.mrb[0].mxu0
      %v610 = vadd.f32 %v298, %v609
      %v611 = vpop.f32.mrb[0].mxu0
      %612 = vmatprep.mubr.bf16.mxu0 %v403
      %613 = vmatmul.mubr.bf16.gmra.mrb[0].mxu0 %v402
      %v614 = vpop.f32.mrb[0].mxu0
      %v615 = vadd.f32 %v298, %v614
      %v616 = vpop.f32.mrb[0].mxu0
      %v617 = vpop.f32.mrb[0].mxu0
      %v618 = vadd.f32 %v298, %v617
      %v619 = vpop.f32.mrb[0].mxu0
      %620 = vmatprep.mubr.bf16.mxu0 %v405
      %621 = vmatmul.mubr.bf16.gmra.mrb[0].mxu0 %v404
      %v622 = vpop.f32.mrb[0].mxu0
      %v623 = vadd.f32 %v298, %v622
      %v624 = vpop.f32.mrb[0].mxu0
      %v625 = vpop.f32.mrb[0].mxu0
      %v626 = vadd.f32 %v298, %v625
      %v627 = vpop.f32.mrb[0].mxu0
      %628 = vmatprep.mubr.bf16.mxu0 %v407
      %629 = vmatmul.mubr.bf16.gmra.mrb[0].mxu0 %v406
      %v630 = vpop.f32.mrb[0].mxu0
      %v631 = vadd.f32 %v298, %v630
      %v632 = vpop.f32.mrb[0].mxu0
      %v633 = vpop.f32.mrb[0].mxu0
      %v634 = vadd.f32 %v298, %v633
      %v635 = vpop.f32.mrb[0].mxu0
      %636 = vmatprep.mubr.bf16.mxu0 %v409
      %637 = vmatmul.mubr.bf16.gmra.mrb[0].mxu0 %v408
      %v638 = vpop.f32.mrb[0].mxu0
      %v639 = vadd.f32 %v298, %v638
      %v640 = vpop.f32.mrb[0].mxu0
      %v641 = vpop.f32.mrb[0].mxu0
      %v642 = vadd.f32 %v298, %v641
      %v643 = vpop.f32.mrb[0].mxu0
      %644 = vmatprep.mubr.bf16.mxu0 %v411
      %645 = vmatmul.mubr.bf16.gmra.mrb[0].mxu0 %v410
      %v646 = vpop.f32.mrb[0].mxu0
      %v647 = vadd.f32 %v298, %v646
      %v648 = vpop.f32.mrb[0].mxu0
      %v649 = vpop.f32.mrb[0].mxu0
      %v650 = vadd.f32 %v298, %v649
      %v651 = vpop.f32.mrb[0].mxu0
      %652 = vmatprep.mubr.bf16.mxu0 %v413
      %653 = vmatmul.mubr.bf16.gmra.mrb[0].mxu0 %v412
      %v654 = vpop.f32.mrb[0].mxu0
      %v655 = vadd.f32 %v298, %v654
      %v656 = vpop.f32.mrb[0].mxu0
      %v657 = vpop.f32.mrb[0].mxu0
      %v658 = vadd.f32 %v298, %v657
      %v659 = vpop.f32.mrb[0].mxu0
      %660 = vmatprep.mubr.bf16.mxu0 %v415
      %661 = vmatmul.mubr.bf16.gmra.mrb[0].mxu0 %v414
      %v662 = vpop.f32.mrb[0].mxu0
      %v663 = vadd.f32 %v298, %v662
      %v664 = vpop.f32.mrb[0].mxu0
      %v665 = vpop.f32.mrb[0].mxu0
      %v666 = vadd.f32 %v298, %v665
      %v667 = vpop.f32.mrb[0].mxu0
      %668 = vmatprep.mubr.bf16.mxu0 %v417
      %669 = vmatmul.mubr.bf16.gmra.mrb[0].mxu0 %v416
      %v670 = vpop.f32.mrb[0].mxu0
      %v671 = vadd.f32 %v298, %v670
      %v672 = vpop.f32.mrb[0].mxu0
      %v673 = vpop.f32.mrb[0].mxu0
      %v674 = vadd.f32 %v298, %v673
      %v675 = vpop.f32.mrb[0].mxu0
      %676 = vmatprep.mubr.bf16.mxu0 %v419
      %677 = vmatmul.mubr.bf16.gmra.mrb[0].mxu0 %v418
      %v678 = vpop.f32.mrb[0].mxu0
      %v679 = vadd.f32 %v298, %v678
      %v680 = vpop.f32.mrb[0].mxu0
      %v681 = vpop.f32.mrb[0].mxu0
      %v682 = vadd.f32 %v298, %v681
      %v683 = vpop.f32.mrb[0].mxu0
      %684 = vmatprep.mubr.bf16.mxu0 %v421
      %685 = vmatmul.mubr.bf16.gmra.mrb[0].mxu0 %v420
      %v686 = vpop.f32.mrb[0].mxu0
      %v687 = vadd.f32 %v298, %v686
      %v688 = vpop.f32.mrb[0].mxu0
      %v689 = vpop.f32.mrb[0].mxu0
      %v690 = vadd.f32 %v298, %v689
      %v691 = vpop.f32.mrb[0].mxu0
      %692 = vmatprep.mubr.bf16.mxu0 %v423
      %693 = vmatmul.mubr.bf16.gmra.mrb[0].mxu0 %v422
      %v694 = vpop.f32.mrb[0].mxu0
      %v695 = vadd.f32 %v298, %v694
      %v696 = vpop.f32.mrb[0].mxu0
      %v697 = vpop.f32.mrb[0].mxu0
      %v698 = vadd.f32 %v298, %v697
      %v699 = vpop.f32.mrb[0].mxu0
      %700 = vmatprep.mubr.bf16.mxu0 %v425
      %701 = vmatmul.mubr.bf16.gmra.mrb[0].mxu0 %v424
      %v702 = vpop.f32.mrb[0].mxu0
      %v703 = vadd.f32 %v298, %v702
      %v704 = vpop.f32.mrb[0].mxu0
      %v705 = vpop.f32.mrb[0].mxu0
      %v706 = vadd.f32 %v298, %v705
      %v707 = vpop.f32.mrb[0].mxu0
      %708 = vmatprep.mubr.bf16.mxu0 %v427
      %709 = vmatmul.mubr.bf16.gmra.mrb[0].mxu0 %v426
      %v710 = vpop.f32.mrb[0].mxu0
      %v711 = vadd.f32 %v298, %v710
      %v712 = vpop.f32.mrb[0].mxu0
      %v713 = vpop.f32.mrb[0].mxu0
      %v714 = vadd.f32 %v298, %v713
      %v715 = vpop.f32.mrb[0].mxu0
      %716 = vdwg.mxu0
      %v717 = vmax.f32 %v591, 0.0
      %v718 = vmax.f32 %v594, 0.0
      %v719 = vmax.f32 %v599, 0.0
      %v720 = vmax.f32 %v602, 0.0
      %v721 = vmax.f32 %v607, 0.0
      %v722 = vmax.f32 %v610, 0.0
      %v723 = vmax.f32 %v615, 0.0
      %v724 = vmax.f32 %v618, 0.0
      %v725 = vmax.f32 %v623, 0.0
      %v726 = vmax.f32 %v626, 0.0
      %v727 = vmax.f32 %v631, 0.0
      %v728 = vmax.f32 %v634, 0.0
      %v729 = vmax.f32 %v639, 0.0
      %v730 = vmax.f32 %v642, 0.0
      %v731 = vmax.f32 %v647, 0.0
      %v732 = vmax.f32 %v650, 0.0
      %v733 = vmax.f32 %v655, 0.0
      %v734 = vmax.f32 %v658, 0.0
      %v735 = vmax.f32 %v663, 0.0
      %v736 = vmax.f32 %v666, 0.0
      %v737 = vmax.f32 %v671, 0.0
      %v738 = vmax.f32 %v674, 0.0
      %v739 = vmax.f32 %v679, 0.0
      %v740 = vmax.f32 %v682, 0.0
      %v741 = vmax.f32 %v687, 0.0
      %v742 = vmax.f32 %v690, 0.0
      %v743 = vmax.f32 %v695, 0.0
      %v744 = vmax.f32 %v698, 0.0
      %v745 = vmax.f32 %v703, 0.0
      %v746 = vmax.f32 %v706, 0.0
      %v747 = vmax.f32 %v711, 0.0
      %v748 = vmax.f32 %v714, 0.0
      %v749 = vpack.c.bf16 %v718, %v717
      %v750 = vpack.c.bf16 %v720, %v719
      %v751 = vpack.c.bf16 %v722, %v721
      %v752 = vpack.c.bf16 %v724, %v723
      %v753 = vpack.c.bf16 %v726, %v725
      %v754 = vpack.c.bf16 %v728, %v727
      %v755 = vpack.c.bf16 %v730, %v729
      %v756 = vpack.c.bf16 %v732, %v731
      %v757 = vpack.c.bf16 %v734, %v733
      %v758 = vpack.c.bf16 %v736, %v735
      %v759 = vpack.c.bf16 %v738, %v737
      %v760 = vpack.c.bf16 %v740, %v739
      %v761 = vpack.c.bf16 %v742, %v741
      %v762 = vpack.c.bf16 %v744, %v743
      %v763 = vpack.c.bf16 %v746, %v745
      %v764 = vpack.c.bf16 %v748, %v747
      %v781 = vunpack.c.l.b16 %v749
      %v782 = vunpack.c.h.b16 %v749
      %v783 = vunpack.c.l.b16 %v750
      %v784 = vunpack.c.h.b16 %v750
      %v785 = vunpack.c.l.b16 %v751
      %v786 = vunpack.c.h.b16 %v751
      %v787 = vunpack.c.l.b16 %v752
      %v788 = vunpack.c.h.b16 %v752
      %v789 = vunpack.c.l.b16 %v753
      %v790 = vunpack.c.h.b16 %v753
      %v791 = vunpack.c.l.b16 %v754
      %v792 = vunpack.c.h.b16 %v754
      %v793 = vunpack.c.l.b16 %v755
      %v794 = vunpack.c.h.b16 %v755
      %v795 = vunpack.c.l.b16 %v756
      %v796 = vunpack.c.h.b16 %v756
      %v797 = vunpack.c.l.b16 %v757
      %v798 = vunpack.c.h.b16 %v757
      %v799 = vunpack.c.l.b16 %v758
      %v800 = vunpack.c.h.b16 %v758
      %v801 = vunpack.c.l.b16 %v759
      %v802 = vunpack.c.h.b16 %v759
      %v803 = vunpack.c.l.b16 %v760
      %v804 = vunpack.c.h.b16 %v760
      %v805 = vunpack.c.l.b16 %v761
      %v806 = vunpack.c.h.b16 %v761
      %v807 = vunpack.c.l.b16 %v762
      %v808 = vunpack.c.h.b16 %v762
      %v809 = vunpack.c.l.b16 %v763
      %v810 = vunpack.c.h.b16 %v763
      %v811 = vunpack.c.l.b16 %v764
      %v812 = vunpack.c.h.b16 %v764
      %v813 = vpack.c.b16 %v781, %v781
      %v814 = vpack.c.b16 %v782, %v782
      %v815 = vpack.c.b16 %v783, %v783
      %v816 = vpack.c.b16 %v784, %v784
      %v817 = vpack.c.b16 %v785, %v785
      %v818 = vpack.c.b16 %v786, %v786
      %v819 = vpack.c.b16 %v787, %v787
      %v820 = vpack.c.b16 %v788, %v788
      %v821 = vpack.c.b16 %v789, %v789
      %v822 = vpack.c.b16 %v790, %v790
      %v823 = vpack.c.b16 %v791, %v791
      %v824 = vpack.c.b16 %v792, %v792
      %v825 = vpack.c.b16 %v793, %v793
      %v826 = vpack.c.b16 %v794, %v794
      %v827 = vpack.c.b16 %v795, %v795
      %v828 = vpack.c.b16 %v796, %v796
      %v829 = vpack.c.b16 %v797, %v797
      %v830 = vpack.c.b16 %v798, %v798
      %v831 = vpack.c.b16 %v799, %v799
      %v832 = vpack.c.b16 %v800, %v800
      %v833 = vpack.c.b16 %v801, %v801
      %v834 = vpack.c.b16 %v802, %v802
      %v835 = vpack.c.b16 %v803, %v803
      %v836 = vpack.c.b16 %v804, %v804
      %v837 = vpack.c.b16 %v805, %v805
      %v838 = vpack.c.b16 %v806, %v806
      %v839 = vpack.c.b16 %v807, %v807
      %v840 = vpack.c.b16 %v808, %v808
      %v841 = vpack.c.b16 %v809, %v809
      %v842 = vpack.c.b16 %v810, %v810
      %v843 = vpack.c.b16 %v811, %v811
      %v844 = vpack.c.b16 %v812, %v812
      %877 = vst [vmem:[%s226] sm:$0xf] %v813
      %878 = vst [vmem:[%s226 + $0x4] sm:$0xf] %v814
      %879 = vst [vmem:[%s226 + $0x8] sm:$0xf] %v815
      %880 = vst [vmem:[%s226 + $0xc] sm:$0xf] %v816
      %881 = vst [vmem:[%s226 + $0x10] sm:$0xf] %v817
      %882 = vst [vmem:[%s226 + $0x14] sm:$0xf] %v818
      %883 = vst [vmem:[%s226 + $0x18] sm:$0xf] %v819
      %884 = vst [vmem:[%s226 + $0x1c] sm:$0xf] %v820
      %885 = vst [vmem:[%s226 + $0x20] sm:$0xf] %v821
      %886 = vst [vmem:[%s226 + $0x24] sm:$0xf] %v822
      %887 = vst [vmem:[%s226 + $0x28] sm:$0xf] %v823
      %888 = vst [vmem:[%s226 + $0x2c] sm:$0xf] %v824
      %889 = vst [vmem:[%s226 + $0x30] sm:$0xf] %v825
      %890 = vst [vmem:[%s226 + $0x34] sm:$0xf] %v826
      %891 = vst [vmem:[%s226 + $0x38] sm:$0xf] %v827
      %892 = vst [vmem:[%s226 + $0x3c] sm:$0xf] %v828
      %893 = vst [vmem:[%s226 + $0x40] sm:$0xf] %v829
      %894 = vst [vmem:[%s226 + $0x44] sm:$0xf] %v830
      %895 = vst [vmem:[%s226 + $0x48] sm:$0xf] %v831
      %896 = vst [vmem:[%s226 + $0x4c] sm:$0xf] %v832
      %897 = vst [vmem:[%s226 + $0x50] sm:$0xf] %v833
      %898 = vst [vmem:[%s226 + $0x54] sm:$0xf] %v834
      %899 = vst [vmem:[%s226 + $0x58] sm:$0xf] %v835
      %900 = vst [vmem:[%s226 + $0x5c] sm:$0xf] %v836
      %901 = vst [vmem:[%s226 + $0x60] sm:$0xf] %v837
      %902 = vst [vmem:[%s226 + $0x64] sm:$0xf] %v838
      %903 = vst [vmem:[%s226 + $0x68] sm:$0xf] %v839
      %904 = vst [vmem:[%s226 + $0x6c] sm:$0xf] %v840
      %905 = vst [vmem:[%s226 + $0x70] sm:$0xf] %v841
      %906 = vst [vmem:[%s226 + $0x74] sm:$0xf] %v842
      %907 = vst [vmem:[%s226 + $0x78] sm:$0xf] %v843
      %908 = vst [vmem:[%s226 + $0x7c] sm:$0xf] %v844
      %s909 = smul.u32 32, %s18
      %p910 = scmp.lt.s32.totalorder %s909, 63
      %s911 = scalar_select %p910, %s909, 63
      %p912 = scmp.lt.s32.totalorder %s19, 0
      %s913 = scalar_select %p912, %s19, 0
      %s914 = sadd.s32 %s913, %s911
      %s915 = smul.addr %s914, 4
      %s916 = scalar_lea.vmem %s3, %s915
      // Predicated region
      $region33: #{osnet_forward.7} parent=31 // pred_check
        %p917 = pneg %p124
      $region34: #{osnet_forward.7} parent=31 // pred_check_branch
        %919 = sbr.rel (%p917) target = $region36
      $region35: #{osnet_forward.7} parent=31 // pred_region
        %s920 = smul.u32 32, %s18
      $region36: #{osnet_forward.7} parent=31 // pred_fallthru
        _
    $region32: #{osnet_forward.7} parent=5 // pred_fallthru
      _
    %p921 = scmp.le.s32.totalorder 2, %s9
    // Predicated region
    $region37: #{osnet_forward.7} parent=5 // pred_check
      %p922 = pneg %p921
    $region38: #{osnet_forward.7} parent=5 // pred_check_branch
      %924 = sbr.rel (%p922) target = $region40
    $region39: #{osnet_forward.7} parent=5 // pred_region
      %s925 = ssub.s32 %s9, 2
      // Predicated region
      $region41: #{osnet_forward.7} parent=39 // pred_check
        %p926 = pneg %p130
      $region42: #{osnet_forward.7} parent=39 // pred_check_branch
        %928 = sbr.rel (%p926) target = $region44
      $region43: #{osnet_forward.7} parent=39 // pred_region
        %s929 = smul.u32 32, %s20
        %p930 = scmp.lt.s32.totalorder %s929, 63
        %s931 = scalar_select %p930, %s929, 63
        %p932 = scmp.lt.s32.totalorder %s21, 0
        %s933 = scalar_select %p932, %s21, 0
        %s934 = sadd.s32 %s933, %s931
        %s935 = smul.addr %s934, 4
        %s936 = scalar_lea.vmem %s3, %s935
      $region44: #{osnet_forward.7} parent=39 // pred_fallthru
        _
    $region40: #{osnet_forward.7} parent=5 // pred_fallthru
      _
  $region6: #{osnet_forward.7} parent=0 // loop_footer
    %s13 = sadd.s32 1, %s9
  $region7: #{osnet_forward.7} parent=0 // loop_footer_branch
    %8 = sbr.rel target = $region3
  $region8: #{osnet_forward.7} parent=0 // loop_exit
    _

// kernel: osnet_forward.8
$region0: #{osnet_forward.8}
  #allocation0 [shape = 'u32[]', space=smem, size = 0x4, offset = 0x4, fixed_abs, tag = 'smem constant byte address 0x4 - core index']
  #allocation1 [shape = 'u32[144,128]{1,0:T(1,128)}', space=vmem, size = 0x12000, scoped, tag = 'internal scratch']
  %s0 = inlined_call_operand.vmem [shape: bf16[128,128], index: 0, kind: input, shape index: {}]
  %s1 = inlined_call_operand.vmem [shape: bf16[128,128], index: 1, kind: input, shape index: {}]
  %s2 = inlined_call_operand.vmem [shape: f32[1,128], index: 2, kind: input, shape index: {}]
  %s3 = inlined_call_operand.vmem [shape: bf16[128,128], index: 3, kind: output, shape index: {}]
  %s4 = sld [smem:[#allocation0]]
  $region22: #{osnet_forward.8} parent=0
    _
  %s6 = ssub.s32 1, %s4
  %s7 = scalar_select 0, %s6, %s4
  // Predicated region
  $region2: #{osnet_forward.8} parent=0 // pred_check
    _
  $region3: #{osnet_forward.8} parent=0 // pred_check_branch
    %9 = sbr.rel (0) target = $region5
  $region4: #{osnet_forward.8} parent=0 // pred_region
    _
  $region5: #{osnet_forward.8} parent=0 // pred_fallthru
    _
  // Predicated region
  $region6: #{osnet_forward.8} parent=0 // pred_check
    _
  $region7: #{osnet_forward.8} parent=0 // pred_check_branch
    %11 = sbr.rel (0) target = $region9
  $region8: #{osnet_forward.8} parent=0 // pred_region
    _
  $region9: #{osnet_forward.8} parent=0 // pred_fallthru
    _
  // Predicated region
  $region10: #{osnet_forward.8} parent=0 // pred_check
    _
  $region11: #{osnet_forward.8} parent=0 // pred_check_branch
    %13 = sbr.rel (0) target = $region13
  $region12: #{osnet_forward.8} parent=0 // pred_region
    _
  $region13: #{osnet_forward.8} parent=0 // pred_fallthru
    _
  %v15 = vld [vmem:[%s0] sm:$0xf]
  %v16 = vld [vmem:[%s0 + $0x4] sm:$0xf]
  %v17 = vld [vmem:[%s0 + $0x8] sm:$0xf]
  %v18 = vld [vmem:[%s0 + $0xc] sm:$0xf]
  %v19 = vld [vmem:[%s0 + $0x10] sm:$0xf]
  %v20 = vld [vmem:[%s0 + $0x14] sm:$0xf]
  %v21 = vld [vmem:[%s0 + $0x18] sm:$0xf]
  %v22 = vld [vmem:[%s0 + $0x1c] sm:$0xf]
  %v23 = vld [vmem:[%s0 + $0x20] sm:$0xf]
  %v24 = vld [vmem:[%s0 + $0x24] sm:$0xf]
  %v25 = vld [vmem:[%s0 + $0x28] sm:$0xf]
  %v26 = vld [vmem:[%s0 + $0x2c] sm:$0xf]
  %v27 = vld [vmem:[%s0 + $0x30] sm:$0xf]
  %v28 = vld [vmem:[%s0 + $0x34] sm:$0xf]
  %v29 = vld [vmem:[%s0 + $0x38] sm:$0xf]
  %v30 = vld [vmem:[%s0 + $0x3c] sm:$0xf]
  %v31 = vld [vmem:[%s1] sm:$0xf]
  %v32 = vld [vmem:[%s1 + $0x4] sm:$0xf]
  %v33 = vld [vmem:[%s1 + $0x8] sm:$0xf]
  %v34 = vld [vmem:[%s1 + $0xc] sm:$0xf]
  %v35 = vld [vmem:[%s1 + $0x10] sm:$0xf]
  %v36 = vld [vmem:[%s1 + $0x14] sm:$0xf]
  %v37 = vld [vmem:[%s1 + $0x18] sm:$0xf]
  %v38 = vld [vmem:[%s1 + $0x1c] sm:$0xf]
  %v39 = vld [vmem:[%s1 + $0x20] sm:$0xf]
  %v40 = vld [vmem:[%s1 + $0x24] sm:$0xf]
  %v41 = vld [vmem:[%s1 + $0x28] sm:$0xf]
  %v42 = vld [vmem:[%s1 + $0x2c] sm:$0xf]
  %v43 = vld [vmem:[%s1 + $0x30] sm:$0xf]
  %v44 = vld [vmem:[%s1 + $0x34] sm:$0xf]
  %v45 = vld [vmem:[%s1 + $0x38] sm:$0xf]
  %v46 = vld [vmem:[%s1 + $0x3c] sm:$0xf]
  %v47 = vld [vmem:[%s2] sm:$0x1]
  %v49 = vlaneseq
  %v50 = vshrl.u32 %v49, 7
  %v51 = vsub.s32 0, %v50
  %v52 = vrot.slane %v47, %v51
  %v70 = vunpack.c.l.b16 %v15
  %v71 = vunpack.c.l.b16 %v16
  %v72 = vunpack.c.l.b16 %v17
  %v73 = vunpack.c.l.b16 %v18
  %v74 = vunpack.c.l.b16 %v19
  %v75 = vunpack.c.l.b16 %v20
  %v76 = vunpack.c.l.b16 %v21
  %v77 = vunpack.c.l.b16 %v22
  %v78 = vunpack.c.l.b16 %v23
  %v79 = vunpack.c.l.b16 %v24
  %v80 = vunpack.c.l.b16 %v25
  %v81 = vunpack.c.l.b16 %v26
  %v82 = vunpack.c.l.b16 %v27
  %v83 = vunpack.c.l.b16 %v28
  %v84 = vunpack.c.l.b16 %v29
  %v85 = vunpack.c.l.b16 %v30
  %v86 = vpack.c.b16 %v71, %v70
  %v87 = vpack.c.b16 %v73, %v72
  %v88 = vpack.c.b16 %v75, %v74
  %v89 = vpack.c.b16 %v77, %v76
  %v90 = vpack.c.b16 %v79, %v78
  %v91 = vpack.c.b16 %v81, %v80
  %v92 = vpack.c.b16 %v83, %v82
  %v93 = vpack.c.b16 %v85, %v84
  %v118 = vunpack.c.l.b16 %v31
  %v119 = vunpack.c.l.b16 %v32
  %v120 = vunpack.c.l.b16 %v33
  %v121 = vunpack.c.l.b16 %v34
  %v122 = vunpack.c.l.b16 %v35
  %v123 = vunpack.c.l.b16 %v36
  %v124 = vunpack.c.l.b16 %v37
  %v125 = vunpack.c.l.b16 %v38
  %v126 = vunpack.c.l.b16 %v39
  %v127 = vunpack.c.l.b16 %v40
  %v128 = vunpack.c.l.b16 %v41
  %v129 = vunpack.c.l.b16 %v42
  %v130 = vunpack.c.l.b16 %v43
  %v131 = vunpack.c.l.b16 %v44
  %v132 = vunpack.c.l.b16 %v45
  %v133 = vunpack.c.l.b16 %v46
  %v134 = vpack.c.b16 %v119, %v118
  %v135 = vpack.c.b16 %v121, %v120
  %v136 = vpack.c.b16 %v123, %v122
  %v137 = vpack.c.b16 %v125, %v124
  %v138 = vpack.c.b16 %v127, %v126
  %v139 = vpack.c.b16 %v129, %v128
  %v140 = vpack.c.b16 %v131, %v130
  %v141 = vpack.c.b16 %v133, %v132
  %150 = vmatprep.subr.bf16.mxu0 0
  %151 = vmatpush1.bf16.msra.mxu0 %v134
  %152 = vmatprep.subr.bf16.mxu0 0
  %153 = vmatpush1.bf16.msra.mxu0 %v135
  %154 = vmatprep.subr.bf16.mxu0 0
  %155 = vmatpush1.bf16.msra.mxu0 %v136
  %156 = vmatprep.subr.bf16.mxu0 0
  %157 = vmatpush1.bf16.msra.mxu0 %v137
  %158 = vmatprep.subr.bf16.mxu0 0
  %159 = vmatpush1.bf16.msra.mxu0 %v138
  %160 = vmatprep.subr.bf16.mxu0 0
  %161 = vmatpush1.bf16.msra.mxu0 %v139
  %162 = vmatprep.subr.bf16.mxu0 0
  %163 = vmatpush1.bf16.msra.mxu0 %v140
  %164 = vmatprep.subr.bf16.mxu0 0
  %165 = vmatpush1.bf16.msra.mxu0 %v141
  %166 = vmatprep.subr.bf16.mxu0 0
  %167 = vmatpush1.bf16.msra.mxu0 0
  %168 = vmatprep.subr.bf16.mxu0 0
  %169 = vmatpush1.bf16.msra.mxu0 0
  %170 = vmatprep.subr.bf16.mxu0 0
  %171 = vmatpush1.bf16.msra.mxu0 0
  %172 = vmatprep.subr.bf16.mxu0 0
  %173 = vmatpush1.bf16.msra.mxu0 0
  %174 = vmatprep.subr.bf16.mxu0 0
  %175 = vmatpush1.bf16.msra.mxu0 0
  %176 = vmatprep.subr.bf16.mxu0 0
  %177 = vmatpush1.bf16.msra.mxu0 0
  %178 = vmatprep.subr.bf16.mxu0 0
  %179 = vmatpush1.bf16.msra.mxu0 0
  %180 = vmatprep.subr.bf16.mxu0 0
  %181 = vmatpush1.bf16.msra.mxu0 0
  %182 = vmatprep.mubr.bf16.mxu0 0
  %183 = vmatmul.mubr.bf16.gmra.mrb[0].mxu0 %v86
  %v184 = vpop.f32.mrb[0].mxu0
  %v185 = vadd.f32 %v52, %v184
  %v186 = vpop.f32.mrb[0].mxu0
  %v187 = vpop.f32.mrb[0].mxu0
  %v188 = vadd.f32 %v52, %v187
  %v189 = vpop.f32.mrb[0].mxu0
  %190 = vmatprep.mubr.bf16.mxu0 0
  %191 = vmatmul.mubr.bf16.gmra.mrb[0].mxu0 %v87
  %v192 = vpop.f32.mrb[0].mxu0
  %v193 = vadd.f32 %v52, %v192
  %v194 = vpop.f32.mrb[0].mxu0
  %v195 = vpop.f32.mrb[0].mxu0
  %v196 = vadd.f32 %v52, %v195
  %v197 = vpop.f32.mrb[0].mxu0
  %198 = vmatprep.mubr.bf16.mxu0 0
  %199 = vmatmul.mubr.bf16.gmra.mrb[0].mxu0 %v88
  %v200 = vpop.f32.mrb[0].mxu0
  %v201 = vadd.f32 %v52, %v200
  %v202 = vpop.f32.mrb[0].mxu0
  %v203 = vpop.f32.mrb[0].mxu0
  %v204 = vadd.f32 %v52, %v203
  %v205 = vpop.f32.mrb[0].mxu0
  %206 = vmatprep.mubr.bf16.mxu0 0
  %207 = vmatmul.mubr.bf16.gmra.mrb[0].mxu0 %v89
  %v208 = vpop.f32.mrb[0].mxu0
  %v209 = vadd.f32 %v52, %v208
  %v210 = vpop.f32.mrb[0].mxu0
  %v211 = vpop.f32.mrb[0].mxu0
  %v212 = vadd.f32 %v52, %v211
  %v213 = vpop.f32.mrb[0].mxu0
  %214 = vmatprep.mubr.bf16.mxu0 0
  %215 = vmatmul.mubr.bf16.gmra.mrb[0].mxu0 %v90
  %v216 = vpop.f32.mrb[0].mxu0
  %v217 = vadd.f32 %v52, %v216
  %v218 = vpop.f32.mrb[0].mxu0
  %v219 = vpop.f32.mrb[0].mxu0
  %v220 = vadd.f32 %v52, %v219
  %v221 = vpop.f32.mrb[0].mxu0
  %222 = vmatprep.mubr.bf16.mxu0 0
  %223 = vmatmul.mubr.bf16.gmra.mrb[0].mxu0 %v91
  %v224 = vpop.f32.mrb[0].mxu0
  %v225 = vadd.f32 %v52, %v224
  %v226 = vpop.f32.mrb[0].mxu0
  %v227 = vpop.f32.mrb[0].mxu0
  %v228 = vadd.f32 %v52, %v227
  %v229 = vpop.f32.mrb[0].mxu0
  %230 = vmatprep.mubr.bf16.mxu0 0
  %231 = vmatmul.mubr.bf16.gmra.mrb[0].mxu0 %v92
  %v232 = vpop.f32.mrb[0].mxu0
  %v233 = vadd.f32 %v52, %v232
  %v234 = vpop.f32.mrb[0].mxu0
  %v235 = vpop.f32.mrb[0].mxu0
  %v236 = vadd.f32 %v52, %v235
  %v237 = vpop.f32.mrb[0].mxu0
  %238 = vmatprep.mubr.bf16.mxu0 0
  %239 = vmatmul.mubr.bf16.gmra.mrb[0].mxu0 %v93
  %v240 = vpop.f32.mrb[0].mxu0
  %v241 = vadd.f32 %v52, %v240
  %v242 = vpop.f32.mrb[0].mxu0
  %v243 = vpop.f32.mrb[0].mxu0
  %v244 = vadd.f32 %v52, %v243
  %v245 = vpop.f32.mrb[0].mxu0
  %246 = vdwg.mxu0
  %v247 = vmax.f32 %v185, 0.0
  %v248 = vmax.f32 %v188, 0.0
  %v249 = vmax.f32 %v193, 0.0
  %v250 = vmax.f32 %v196, 0.0
  %v251 = vmax.f32 %v201, 0.0
  %v252 = vmax.f32 %v204, 0.0
  %v253 = vmax.f32 %v209, 0.0
  %v254 = vmax.f32 %v212, 0.0
  %v255 = vmax.f32 %v217, 0.0
  %v256 = vmax.f32 %v220, 0.0
  %v257 = vmax.f32 %v225, 0.0
  %v258 = vmax.f32 %v228, 0.0
  %v259 = vmax.f32 %v233, 0.0
  %v260 = vmax.f32 %v236, 0.0
  %v261 = vmax.f32 %v241, 0.0
  %v262 = vmax.f32 %v244, 0.0
  %v263 = vpack.c.bf16 %v248, %v247
  %v264 = vpack.c.bf16 %v250, %v249
  %v265 = vpack.c.bf16 %v252, %v251
  %v266 = vpack.c.bf16 %v254, %v253
  %v267 = vpack.c.bf16 %v256, %v255
  %v268 = vpack.c.bf16 %v258, %v257
  %v269 = vpack.c.bf16 %v260, %v259
  %v270 = vpack.c.bf16 %v262, %v261
  %v279 = vunpack.c.l.b16 %v263
  %v280 = vunpack.c.h.b16 %v263
  %v281 = vunpack.c.l.b16 %v264
  %v282 = vunpack.c.h.b16 %v264
  %v283 = vunpack.c.l.b16 %v265
  %v284 = vunpack.c.h.b16 %v265
  %v285 = vunpack.c.l.b16 %v266
  %v286 = vunpack.c.h.b16 %v266
  %v287 = vunpack.c.l.b16 %v267
  %v288 = vunpack.c.h.b16 %v267
  %v289 = vunpack.c.l.b16 %v268
  %v290 = vunpack.c.h.b16 %v268
  %v291 = vunpack.c.l.b16 %v269
  %v292 = vunpack.c.h.b16 %v269
  %v293 = vunpack.c.l.b16 %v270
  %v294 = vunpack.c.h.b16 %v270
  %v295 = vpack.c.b16 %v279, %v279
  %v296 = vpack.c.b16 %v280, %v280
  %v297 = vpack.c.b16 %v281, %v281
  %v298 = vpack.c.b16 %v282, %v282
  %v299 = vpack.c.b16 %v283, %v283
  %v300 = vpack.c.b16 %v284, %v284
  %v301 = vpack.c.b16 %v285, %v285
  %v302 = vpack.c.b16 %v286, %v286
  %v303 = vpack.c.b16 %v287, %v287
  %v304 = vpack.c.b16 %v288, %v288
  %v305 = vpack.c.b16 %v289, %v289
  %v306 = vpack.c.b16 %v290, %v290
  %v307 = vpack.c.b16 %v291, %v291
  %v308 = vpack.c.b16 %v292, %v292
  %v309 = vpack.c.b16 %v293, %v293
  %v310 = vpack.c.b16 %v294, %v294
  %327 = vst [vmem:[%s3] sm:$0xf] %v295
  %328 = vst [vmem:[%s3 + $0x4] sm:$0xf] %v296
  %329 = vst [vmem:[%s3 + $0x8] sm:$0xf] %v297
  %330 = vst [vmem:[%s3 + $0xc] sm:$0xf] %v298
  %331 = vst [vmem:[%s3 + $0x10] sm:$0xf] %v299
  %332 = vst [vmem:[%s3 + $0x14] sm:$0xf] %v300
  %333 = vst [vmem:[%s3 + $0x18] sm:$0xf] %v301
  %334 = vst [vmem:[%s3 + $0x1c] sm:$0xf] %v302
  %335 = vst [vmem:[%s3 + $0x20] sm:$0xf] %v303
  %336 = vst [vmem:[%s3 + $0x24] sm:$0xf] %v304
  %337 = vst [vmem:[%s3 + $0x28] sm:$0xf] %v305
  %338 = vst [vmem:[%s3 + $0x2c] sm:$0xf] %v306
  %339 = vst [vmem:[%s3 + $0x30] sm:$0xf] %v307
  %340 = vst [vmem:[%s3 + $0x34] sm:$0xf] %v308
  %341 = vst [vmem:[%s3 + $0x38] sm:$0xf] %v309
  %342 = vst [vmem:[%s3 + $0x3c] sm:$0xf] %v310
  // Predicated region
  $region14: #{osnet_forward.8} parent=0 // pred_check
    _
  $region15: #{osnet_forward.8} parent=0 // pred_check_branch
    %344 = sbr.rel (0) target = $region17
  $region16: #{osnet_forward.8} parent=0 // pred_region
    _
  $region17: #{osnet_forward.8} parent=0 // pred_fallthru
    _
  // Predicated region
  $region18: #{osnet_forward.8} parent=0 // pred_check
    _
  $region19: #{osnet_forward.8} parent=0 // pred_check_branch
    %346 = sbr.rel (0) target = $region21
  $region20: #{osnet_forward.8} parent=0 // pred_region
    _
  $region21: #{osnet_forward.8} parent=0 // pred_fallthru
    _

// kernel: osnet_forward.9
$region0: #{osnet_forward.9}
  #allocation0 [shape = 'u32[]', space=smem, size = 0x4, offset = 0x4, fixed_abs, tag = 'smem constant byte address 0x4 - core index']
  #allocation1 [shape = 'u32[144,128]{1,0:T(1,128)}', space=vmem, size = 0x12000, scoped, tag = 'internal scratch']
  %s0 = inlined_call_operand.vmem [shape: bf16[128,16], index: 0, kind: input, shape index: {}]
  %s1 = inlined_call_operand.vmem [shape: bf16[16,128], index: 1, kind: input, shape index: {}]
  %s2 = inlined_call_operand.vmem [shape: f32[1,128], index: 2, kind: input, shape index: {}]
  %s3 = inlined_call_operand.vmem [shape: bf16[128,128], index: 3, kind: output, shape index: {}]
  %s4 = sld [smem:[#allocation0]]
  $region22: #{osnet_forward.9} parent=0
    _
  %s6 = ssub.s32 1, %s4
  %s7 = scalar_select 0, %s6, %s4
  // Predicated region
  $region2: #{osnet_forward.9} parent=0 // pred_check
    _
  $region3: #{osnet_forward.9} parent=0 // pred_check_branch
    %9 = sbr.rel (0) target = $region5
  $region4: #{osnet_forward.9} parent=0 // pred_region
    _
  $region5: #{osnet_forward.9} parent=0 // pred_fallthru
    _
  // Predicated region
  $region6: #{osnet_forward.9} parent=0 // pred_check
    _
  $region7: #{osnet_forward.9} parent=0 // pred_check_branch
    %11 = sbr.rel (0) target = $region9
  $region8: #{osnet_forward.9} parent=0 // pred_region
    _
  $region9: #{osnet_forward.9} parent=0 // pred_fallthru
    _
  // Predicated region
  $region10: #{osnet_forward.9} parent=0 // pred_check
    _
  $region11: #{osnet_forward.9} parent=0 // pred_check_branch
    %13 = sbr.rel (0) target = $region13
  $region12: #{osnet_forward.9} parent=0 // pred_region
    _
  $region13: #{osnet_forward.9} parent=0 // pred_fallthru
    _
  %v15 = vld [vmem:[%s0] sm:$0xf]
  %v16 = vld [vmem:[%s0 + $0x4] sm:$0xf]
  %v17 = vld [vmem:[%s0 + $0x8] sm:$0xf]
  %v18 = vld [vmem:[%s0 + $0xc] sm:$0xf]
  %v19 = vld [vmem:[%s0 + $0x10] sm:$0xf]
  %v20 = vld [vmem:[%s0 + $0x14] sm:$0xf]
  %v21 = vld [vmem:[%s0 + $0x18] sm:$0xf]
  %v22 = vld [vmem:[%s0 + $0x1c] sm:$0xf]
  %v23 = vld [vmem:[%s0 + $0x20] sm:$0xf]
  %v24 = vld [vmem:[%s0 + $0x24] sm:$0xf]
  %v25 = vld [vmem:[%s0 + $0x28] sm:$0xf]
  %v26 = vld [vmem:[%s0 + $0x2c] sm:$0xf]
  %v27 = vld [vmem:[%s0 + $0x30] sm:$0xf]
  %v28 = vld [vmem:[%s0 + $0x34] sm:$0xf]
  %v29 = vld [vmem:[%s0 + $0x38] sm:$0xf]
  %v30 = vld [vmem:[%s0 + $0x3c] sm:$0xf]
  %v31 = vld [vmem:[%s1] sm:$0xf]
  %v32 = vld [vmem:[%s1 + $0x4] sm:$0xf]
  %v33 = vld [vmem:[%s2] sm:$0x1]
  %v35 = vlaneseq
  %v36 = vshrl.u32 %v35, 7
  %v37 = vsub.s32 0, %v36
  %v38 = vrot.slane %v33, %v37
  %v56 = vunpack.c.l.b16 %v15
  %v57 = vunpack.c.l.b16 %v16
  %v58 = vunpack.c.l.b16 %v17
  %v59 = vunpack.c.l.b16 %v18
  %v60 = vunpack.c.l.b16 %v19
  %v61 = vunpack.c.l.b16 %v20
  %v62 = vunpack.c.l.b16 %v21
  %v63 = vunpack.c.l.b16 %v22
  %v64 = vunpack.c.l.b16 %v23
  %v65 = vunpack.c.l.b16 %v24
  %v66 = vunpack.c.l.b16 %v25
  %v67 = vunpack.c.l.b16 %v26
  %v68 = vunpack.c.l.b16 %v27
  %v69 = vunpack.c.l.b16 %v28
  %v70 = vunpack.c.l.b16 %v29
  %v71 = vunpack.c.l.b16 %v30
  %v72 = vpack.c.b16 %v57, %v56
  %v73 = vpack.c.b16 %v59, %v58
  %v74 = vpack.c.b16 %v61, %v60
  %v75 = vpack.c.b16 %v63, %v62
  %v76 = vpack.c.b16 %v65, %v64
  %v77 = vpack.c.b16 %v67, %v66
  %v78 = vpack.c.b16 %v69, %v68
  %v79 = vpack.c.b16 %v71, %v70
  %v82 = vunpack.c.l.b16 %v31
  %v83 = vunpack.c.l.b16 %v32
  %v84 = vpack.c.b16 %v83, %v82
  %vm86 = vcmask 130048
  %v88 = vsel %vm86, %v72, 0
  %v91 = vsel %vm86, %v73, 0
  %v94 = vsel %vm86, %v74, 0
  %v97 = vsel %vm86, %v75, 0
  %v100 = vsel %vm86, %v76, 0
  %v103 = vsel %vm86, %v77, 0
  %v106 = vsel %vm86, %v78, 0
  %v109 = vsel %vm86, %v79, 0
  %111 = vmatprep.subr.bf16.mxu0 0
  %112 = vmatpush1.bf16.msra.mxu0 %v84
  %113 = vmatprep.subr.bf16.mxu0 0
  %114 = vmatpush1.bf16.msra.mxu0 0
  %115 = vmatprep.subr.bf16.mxu0 0
  %116 = vmatpush1.bf16.msra.mxu0 0
  %117 = vmatprep.subr.bf16.mxu0 0
  %118 = vmatpush1.bf16.msra.mxu0 0
  %119 = vmatprep.subr.bf16.mxu0 0
  %120 = vmatpush1.bf16.msra.mxu0 0
  %121 = vmatprep.subr.bf16.mxu0 0
  %122 = vmatpush1.bf16.msra.mxu0 0
  %123 = vmatprep.subr.bf16.mxu0 0
  %124 = vmatpush1.bf16.msra.mxu0 0
  %125 = vmatprep.subr.bf16.mxu0 0
  %126 = vmatpush1.bf16.msra.mxu0 0
  %127 = vmatprep.subr.bf16.mxu0 0
  %128 = vmatpush1.bf16.msra.mxu0 0
  %129 = vmatprep.subr.bf16.mxu0 0
  %130 = vmatpush1.bf16.msra.mxu0 0
  %131 = vmatprep.subr.bf16.mxu0 0
  %132 = vmatpush1.bf16.msra.mxu0 0
  %133 = vmatprep.subr.bf16.mxu0 0
  %134 = vmatpush1.bf16.msra.mxu0 0
  %135 = vmatprep.subr.bf16.mxu0 0
  %136 = vmatpush1.bf16.msra.mxu0 0
  %137 = vmatprep.subr.bf16.mxu0 0
  %138 = vmatpush1.bf16.msra.mxu0 0
  %139 = vmatprep.subr.bf16.mxu0 0
  %140 = vmatpush1.bf16.msra.mxu0 0
  %141 = vmatprep.subr.bf16.mxu0 0
  %142 = vmatpush1.bf16.msra.mxu0 0
  %143 = vmatprep.mubr.bf16.mxu0 0
  %144 = vmatmul.mubr.bf16.gmra.mrb[0].mxu0 %v88
  %v145 = vpop.f32.mrb[0].mxu0
  %v146 = vadd.f32 %v38, %v145
  %v147 = vpop.f32.mrb[0].mxu0
  %v148 = vpop.f32.mrb[0].mxu0
  %v149 = vadd.f32 %v38, %v148
  %v150 = vpop.f32.mrb[0].mxu0
  %151 = vmatprep.mubr.bf16.mxu0 0
  %152 = vmatmul.mubr.bf16.gmra.mrb[0].mxu0 %v91
  %v153 = vpop.f32.mrb[0].mxu0
  %v154 = vadd.f32 %v38, %v153
  %v155 = vpop.f32.mrb[0].mxu0
  %v156 = vpop.f32.mrb[0].mxu0
  %v157 = vadd.f32 %v38, %v156
  %v158 = vpop.f32.mrb[0].mxu0
  %159 = vmatprep.mubr.bf16.mxu0 0
  %160 = vmatmul.mubr.bf16.gmra.mrb[0].mxu0 %v94
  %v161 = vpop.f32.mrb[0].mxu0
  %v162 = vadd.f32 %v38, %v161
  %v163 = vpop.f32.mrb[0].mxu0
  %v164 = vpop.f32.mrb[0].mxu0
  %v165 = vadd.f32 %v38, %v164
  %v166 = vpop.f32.mrb[0].mxu0
  %167 = vmatprep.mubr.bf16.mxu0 0
  %168 = vmatmul.mubr.bf16.gmra.mrb[0].mxu0 %v97
  %v169 = vpop.f32.mrb[0].mxu0
  %v170 = vadd.f32 %v38, %v169
  %v171 = vpop.f32.mrb[0].mxu0
  %v172 = vpop.f32.mrb[0].mxu0
  %v173 = vadd.f32 %v38, %v172
  %v174 = vpop.f32.mrb[0].mxu0
  %175 = vmatprep.mubr.bf16.mxu0 0
  %176 = vmatmul.mubr.bf16.gmra.mrb[0].mxu0 %v100
  %v177 = vpop.f32.mrb[0].mxu0
  %v178 = vadd.f32 %v38, %v177
  %v179 = vpop.f32.mrb[0].mxu0
  %v180 = vpop.f32.mrb[0].mxu0
  %v181 = vadd.f32 %v38, %v180
  %v182 = vpop.f32.mrb[0].mxu0
  %183 = vmatprep.mubr.bf16.mxu0 0
  %184 = vmatmul.mubr.bf16.gmra.mrb[0].mxu0 %v103
  %v185 = vpop.f32.mrb[0].mxu0
  %v186 = vadd.f32 %v38, %v185
  %v187 = vpop.f32.mrb[0].mxu0
  %v188 = vpop.f32.mrb[0].mxu0
  %v189 = vadd.f32 %v38, %v188
  %v190 = vpop.f32.mrb[0].mxu0
  %191 = vmatprep.mubr.bf16.mxu0 0
  %192 = vmatmul.mubr.bf16.gmra.mrb[0].mxu0 %v106
  %v193 = vpop.f32.mrb[0].mxu0
  %v194 = vadd.f32 %v38, %v193
  %v195 = vpop.f32.mrb[0].mxu0
  %v196 = vpop.f32.mrb[0].mxu0
  %v197 = vadd.f32 %v38, %v196
  %v198 = vpop.f32.mrb[0].mxu0
  %199 = vmatprep.mubr.bf16.mxu0 0
  %200 = vmatmul.mubr.bf16.gmra.mrb[0].mxu0 %v109
  %v201 = vpop.f32.mrb[0].mxu0
  %v202 = vadd.f32 %v38, %v201
  %v203 = vpop.f32.mrb[0].mxu0
  %v204 = vpop.f32.mrb[0].mxu0
  %v205 = vadd.f32 %v38, %v204
  %v206 = vpop.f32.mrb[0].mxu0
  %207 = vdwg.mxu0
  %v208 = vmax.f32 %v146, 0.0
  %v209 = vmax.f32 %v149, 0.0
  %v210 = vmax.f32 %v154, 0.0
  %v211 = vmax.f32 %v157, 0.0
  %v212 = vmax.f32 %v162, 0.0
  %v213 = vmax.f32 %v165, 0.0
  %v214 = vmax.f32 %v170, 0.0
  %v215 = vmax.f32 %v173, 0.0
  %v216 = vmax.f32 %v178, 0.0
  %v217 = vmax.f32 %v181, 0.0
  %v218 = vmax.f32 %v186, 0.0
  %v219 = vmax.f32 %v189, 0.0
  %v220 = vmax.f32 %v194, 0.0
  %v221 = vmax.f32 %v197, 0.0
  %v222 = vmax.f32 %v202, 0.0
  %v223 = vmax.f32 %v205, 0.0
  %v224 = vpack.c.bf16 %v209, %v208
  %v225 = vpack.c.bf16 %v211, %v210
  %v226 = vpack.c.bf16 %v213, %v212
  %v227 = vpack.c.bf16 %v215, %v214
  %v228 = vpack.c.bf16 %v217, %v216
  %v229 = vpack.c.bf16 %v219, %v218
  %v230 = vpack.c.bf16 %v221, %v220
  %v231 = vpack.c.bf16 %v223, %v222
  %v240 = vunpack.c.l.b16 %v224
  %v241 = vunpack.c.h.b16 %v224
  %v242 = vunpack.c.l.b16 %v225
  %v243 = vunpack.c.h.b16 %v225
  %v244 = vunpack.c.l.b16 %v226
  %v245 = vunpack.c.h.b16 %v226
  %v246 = vunpack.c.l.b16 %v227
  %v247 = vunpack.c.h.b16 %v227
  %v248 = vunpack.c.l.b16 %v228
  %v249 = vunpack.c.h.b16 %v228
  %v250 = vunpack.c.l.b16 %v229
  %v251 = vunpack.c.h.b16 %v229
  %v252 = vunpack.c.l.b16 %v230
  %v253 = vunpack.c.h.b16 %v230
  %v254 = vunpack.c.l.b16 %v231
  %v255 = vunpack.c.h.b16 %v231
  %v256 = vpack.c.b16 %v240, %v240
  %v257 = vpack.c.b16 %v241, %v241
  %v258 = vpack.c.b16 %v242, %v242
  %v259 = vpack.c.b16 %v243, %v243
  %v260 = vpack.c.b16 %v244, %v244
  %v261 = vpack.c.b16 %v245, %v245
  %v262 = vpack.c.b16 %v246, %v246
  %v263 = vpack.c.b16 %v247, %v247
  %v264 = vpack.c.b16 %v248, %v248
  %v265 = vpack.c.b16 %v249, %v249
  %v266 = vpack.c.b16 %v250, %v250
  %v267 = vpack.c.b16 %v251, %v251
  %v268 = vpack.c.b16 %v252, %v252
  %v269 = vpack.c.b16 %v253, %v253
  %v270 = vpack.c.b16 %v254, %v254
  %v271 = vpack.c.b16 %v255, %v255
  %288 = vst [vmem:[%s3] sm:$0xf] %v256
  %289 = vst [vmem:[%s3 + $0x4] sm:$0xf] %v257
  %290 = vst [vmem:[%s3 + $0x8] sm:$0xf] %v258
  %291 = vst [vmem:[%s3 + $0xc] sm:$0xf] %v259
  %292 = vst [vmem:[%s3 + $0x10] sm:$0xf] %v260
  %293 = vst [vmem:[%s3 + $0x14] sm:$0xf] %v261
  %294 = vst [vmem:[%s3 + $0x18] sm:$0xf] %v262
  %295 = vst [vmem:[%s3 + $0x1c] sm:$0xf] %v263
  %296 = vst [vmem:[%s3 + $0x20] sm:$0xf] %v264
  %297 = vst [vmem:[%s3 + $0x24] sm:$0xf] %v265
  %298 = vst [vmem:[%s3 + $0x28] sm:$0xf] %v266
  %299 = vst [vmem:[%s3 + $0x2c] sm:$0xf] %v267
  %300 = vst [vmem:[%s3 + $0x30] sm:$0xf] %v268
  %301 = vst [vmem:[%s3 + $0x34] sm:$0xf] %v269
  %302 = vst [vmem:[%s3 + $0x38] sm:$0xf] %v270
  %303 = vst [vmem:[%s3 + $0x3c] sm:$0xf] %v271
  // Predicated region
  $region14: #{osnet_forward.9} parent=0 // pred_check
    _
  $region15: #{osnet_forward.9} parent=0 // pred_check_branch
    %305 = sbr.rel (0) target = $region17
  $region16: #{osnet_forward.9} parent=0 // pred_region
    _
  $region17: #{osnet_forward.9} parent=0 // pred_fallthru
    _
  // Predicated region
  $region18: #{osnet_forward.9} parent=0 // pred_check
    _
  $region19: #{osnet_forward.9} parent=0 // pred_check_branch
    %307 = sbr.rel (0) target = $region21
  $region20: #{osnet_forward.9} parent=0 // pred_region
    _
  $region21: #{osnet_forward.9} parent=0 // pred_fallthru
    _

// kernel: osnet_forward.10
$region0: #{osnet_forward.10}
  #allocation0 [shape = 'u32[]', space=smem, size = 0x4, offset = 0x4, fixed_abs, tag = 'smem constant byte address 0x4 - core index']
  #allocation1 [shape = 'u32[144,128]{1,0:T(1,128)}', space=vmem, size = 0x12000, scoped, tag = 'internal scratch']
  %s0 = inlined_call_operand.vmem [shape: bf16[32,256], index: 0, kind: input, shape index: {}]
  %s1 = inlined_call_operand.vmem [shape: bf16[256,128], index: 1, kind: input, shape index: {}]
  %s2 = inlined_call_operand.vmem [shape: f32[1,128], index: 2, kind: input, shape index: {}]
  %s3 = inlined_call_operand.vmem [shape: bf16[32,128], index: 3, kind: output, shape index: {}]
  %s4 = sld [smem:[#allocation0]]
  $region22: #{osnet_forward.10} parent=0
    _
  %s6 = ssub.s32 1, %s4
  %s7 = scalar_select 0, %s6, %s4
  // Predicated region
  $region2: #{osnet_forward.10} parent=0 // pred_check
    _
  $region3: #{osnet_forward.10} parent=0 // pred_check_branch
    %9 = sbr.rel (0) target = $region5
  $region4: #{osnet_forward.10} parent=0 // pred_region
    _
  $region5: #{osnet_forward.10} parent=0 // pred_fallthru
    _
  // Predicated region
  $region6: #{osnet_forward.10} parent=0 // pred_check
    _
  $region7: #{osnet_forward.10} parent=0 // pred_check_branch
    %11 = sbr.rel (0) target = $region9
  $region8: #{osnet_forward.10} parent=0 // pred_region
    _
  $region9: #{osnet_forward.10} parent=0 // pred_fallthru
    _
  // Predicated region
  $region10: #{osnet_forward.10} parent=0 // pred_check
    _
  $region11: #{osnet_forward.10} parent=0 // pred_check_branch
    %13 = sbr.rel (0) target = $region13
  $region12: #{osnet_forward.10} parent=0 // pred_region
    _
  $region13: #{osnet_forward.10} parent=0 // pred_fallthru
    _
  %v15 = vld [vmem:[%s0] sm:$0xff]
  %v16 = vld [vmem:[%s0 + $0x8] sm:$0xff]
  %v17 = vld [vmem:[%s0 + $0x10] sm:$0xff]
  %v18 = vld [vmem:[%s0 + $0x18] sm:$0xff]
  %v19 = vld [vmem:[%s1] sm:$0xf]
  %v20 = vld [vmem:[%s1 + $0x4] sm:$0xf]
  %v21 = vld [vmem:[%s1 + $0x8] sm:$0xf]
  %v22 = vld [vmem:[%s1 + $0xc] sm:$0xf]
  %v23 = vld [vmem:[%s1 + $0x10] sm:$0xf]
  %v24 = vld [vmem:[%s1 + $0x14] sm:$0xf]
  %v25 = vld [vmem:[%s1 + $0x18] sm:$0xf]
  %v26 = vld [vmem:[%s1 + $0x1c] sm:$0xf]
  %v27 = vld [vmem:[%s1 + $0x20] sm:$0xf]
  %v28 = vld [vmem:[%s1 + $0x24] sm:$0xf]
  %v29 = vld [vmem:[%s1 + $0x28] sm:$0xf]
  %v30 = vld [vmem:[%s1 + $0x2c] sm:$0xf]
  %v31 = vld [vmem:[%s1 + $0x30] sm:$0xf]
  %v32 = vld [vmem:[%s1 + $0x34] sm:$0xf]
  %v33 = vld [vmem:[%s1 + $0x38] sm:$0xf]
  %v34 = vld [vmem:[%s1 + $0x3c] sm:$0xf]
  %v35 = vld [vmem:[%s1 + $0x40] sm:$0xf]
  %v36 = vld [vmem:[%s1 + $0x44] sm:$0xf]
  %v37 = vld [vmem:[%s1 + $0x48] sm:$0xf]
  %v38 = vld [vmem:[%s1 + $0x4c] sm:$0xf]
  %v39 = vld [vmem:[%s1 + $0x50] sm:$0xf]
  %v40 = vld [vmem:[%s1 + $0x54] sm:$0xf]
  %v41 = vld [vmem:[%s1 + $0x58] sm:$0xf]
  %v42 = vld [vmem:[%s1 + $0x5c] sm:$0xf]
  %v43 = vld [vmem:[%s1 + $0x60] sm:$0xf]
  %v44 = vld [vmem:[%s1 + $0x64] sm:$0xf]
  %v45 = vld [vmem:[%s1 + $0x68] sm:$0xf]
  %v46 = vld [vmem:[%s1 + $0x6c] sm:$0xf]
  %v47 = vld [vmem:[%s1 + $0x70] sm:$0xf]
  %v48 = vld [vmem:[%s1 + $0x74] sm:$0xf]
  %v49 = vld [vmem:[%s1 + $0x78] sm:$0xf]
  %v50 = vld [vmem:[%s1 + $0x7c] sm:$0xf]
  %v51 = vld [vmem:[%s2] sm:$0x1]
  %v53 = vlaneseq
  %v54 = vshrl.u32 %v53, 7
  %v55 = vsub.s32 0, %v54
  %v56 = vrot.slane %v51, %v55
  %v62 = vunpack.c.l.b16 %v15
  %v63 = vunpack.c.h.b16 %v15
  %v64 = vunpack.c.l.b16 %v16
  %v65 = vunpack.c.h.b16 %v16
  %v66 = vunpack.c.l.b16 %v17
  %v67 = vunpack.c.h.b16 %v17
  %v68 = vunpack.c.l.b16 %v18
  %v69 = vunpack.c.h.b16 %v18
  %v70 = vpack.c.b16 %v64, %v62
  %v71 = vpack.c.b16 %v65, %v63
  %v72 = vpack.c.b16 %v68, %v66
  %v73 = vpack.c.b16 %v69, %v67
  %v110 = vunpack.c.l.b16 %v19
  %v111 = vunpack.c.l.b16 %v20
  %v112 = vunpack.c.l.b16 %v21
  %v113 = vunpack.c.l.b16 %v22
  %v114 = vunpack.c.l.b16 %v23
  %v115 = vunpack.c.l.b16 %v24
  %v116 = vunpack.c.l.b16 %v25
  %v117 = vunpack.c.l.b16 %v26
  %v118 = vunpack.c.l.b16 %v27
  %v119 = vunpack.c.l.b16 %v28
  %v120 = vunpack.c.l.b16 %v29
  %v121 = vunpack.c.l.b16 %v30
  %v122 = vunpack.c.l.b16 %v31
  %v123 = vunpack.c.l.b16 %v32
  %v124 = vunpack.c.l.b16 %v33
  %v125 = vunpack.c.l.b16 %v34
  %v126 = vunpack.c.l.b16 %v35
  %v127 = vunpack.c.l.b16 %v36
  %v128 = vunpack.c.l.b16 %v37
  %v129 = vunpack.c.l.b16 %v38
  %v130 = vunpack.c.l.b16 %v39
  %v131 = vunpack.c.l.b16 %v40
  %v132 = vunpack.c.l.b16 %v41
  %v133 = vunpack.c.l.b16 %v42
  %v134 = vunpack.c.l.b16 %v43
  %v135 = vunpack.c.l.b16 %v44
  %v136 = vunpack.c.l.b16 %v45
  %v137 = vunpack.c.l.b16 %v46
  %v138 = vunpack.c.l.b16 %v47
  %v139 = vunpack.c.l.b16 %v48
  %v140 = vunpack.c.l.b16 %v49
  %v141 = vunpack.c.l.b16 %v50
  %v142 = vpack.c.b16 %v111, %v110
  %v143 = vpack.c.b16 %v113, %v112
  %v144 = vpack.c.b16 %v115, %v114
  %v145 = vpack.c.b16 %v117, %v116
  %v146 = vpack.c.b16 %v119, %v118
  %v147 = vpack.c.b16 %v121, %v120
  %v148 = vpack.c.b16 %v123, %v122
  %v149 = vpack.c.b16 %v125, %v124
  %v150 = vpack.c.b16 %v127, %v126
  %v151 = vpack.c.b16 %v129, %v128
  %v152 = vpack.c.b16 %v131, %v130
  %v153 = vpack.c.b16 %v133, %v132
  %v154 = vpack.c.b16 %v135, %v134
  %v155 = vpack.c.b16 %v137, %v136
  %v156 = vpack.c.b16 %v139, %v138
  %v157 = vpack.c.b16 %v141, %v140
  %174 = vmatprep.subr.bf16.mxu0 0
  %175 = vmatpush1.bf16.msra.mxu0 %v142
  %176 = vmatprep.subr.bf16.mxu0 0
  %177 = vmatpush1.bf16.msra.mxu0 %v143
  %178 = vmatprep.subr.bf16.mxu0 0
  %179 = vmatpush1.bf16.msra.mxu0 %v144
  %180 = vmatprep.subr.bf16.mxu0 0
  %181 = vmatpush1.bf16.msra.mxu0 %v145
  %182 = vmatprep.subr.bf16.mxu0 0
  %183 = vmatpush1.bf16.msra.mxu0 %v146
  %184 = vmatprep.subr.bf16.mxu0 0
  %185 = vmatpush1.bf16.msra.mxu0 %v147
  %186 = vmatprep.subr.bf16.mxu0 0
  %187 = vmatpush1.bf16.msra.mxu0 %v148
  %188 = vmatprep.subr.bf16.mxu0 0
  %189 = vmatpush1.bf16.msra.mxu0 %v149
  %190 = vmatprep.subr.bf16.mxu0 0
  %191 = vmatpush1.bf16.msra.mxu0 %v150
  %192 = vmatprep.subr.bf16.mxu0 0
  %193 = vmatpush1.bf16.msra.mxu0 %v151
  %194 = vmatprep.subr.bf16.mxu0 0
  %195 = vmatpush1.bf16.msra.mxu0 %v152
  %196 = vmatprep.subr.bf16.mxu0 0
  %197 = vmatpush1.bf16.msra.mxu0 %v153
  %198 = vmatprep.subr.bf16.mxu0 0
  %199 = vmatpush1.bf16.msra.mxu0 %v154
  %200 = vmatprep.subr.bf16.mxu0 0
  %201 = vmatpush1.bf16.msra.mxu0 %v155
  %202 = vmatprep.subr.bf16.mxu0 0
  %203 = vmatpush1.bf16.msra.mxu0 %v156
  %204 = vmatprep.subr.bf16.mxu0 0
  %205 = vmatpush1.bf16.msra.mxu0 %v157
  %206 = vmatprep.mubr.bf16.mxu0 %v71
  %207 = vmatmul.mubr.bf16.gmra.mrb[0].mxu0 %v70
  %v208 = vpop.f32.mrb[0].mxu0
  %v209 = vadd.f32 %v56, %v208
  %v210 = vpop.f32.mrb[0].mxu0
  %v211 = vpop.f32.mrb[0].mxu0
  %v212 = vadd.f32 %v56, %v211
  %v213 = vpop.f32.mrb[0].mxu0
  %214 = vmatprep.mubr.bf16.mxu0 %v73
  %215 = vmatmul.mubr.bf16.gmra.mrb[0].mxu0 %v72
  %v216 = vpop.f32.mrb[0].mxu0
  %v217 = vadd.f32 %v56, %v216
  %v218 = vpop.f32.mrb[0].mxu0
  %v219 = vpop.f32.mrb[0].mxu0
  %v220 = vadd.f32 %v56, %v219
  %v221 = vpop.f32.mrb[0].mxu0
  %222 = vdwg.mxu0
  %v223 = vmax.f32 %v209, 0.0
  %v224 = vmax.f32 %v212, 0.0
  %v225 = vmax.f32 %v217, 0.0
  %v226 = vmax.f32 %v220, 0.0
  %v227 = vpack.c.bf16 %v224, %v223
  %v228 = vpack.c.bf16 %v226, %v225
  %v231 = vunpack.c.l.b16 %v227
  %v232 = vunpack.c.h.b16 %v227
  %v233 = vunpack.c.l.b16 %v228
  %v234 = vunpack.c.h.b16 %v228
  %v235 = vpack.c.b16 %v231, %v231
  %v236 = vpack.c.b16 %v232, %v232
  %v237 = vpack.c.b16 %v233, %v233
  %v238 = vpack.c.b16 %v234, %v234
  %243 = vst [vmem:[%s3] sm:$0xf] %v235
  %244 = vst [vmem:[%s3 + $0x4] sm:$0xf] %v236
  %245 = vst [vmem:[%s3 + $0x8] sm:$0xf] %v237
  %246 = vst [vmem:[%s3 + $0xc] sm:$0xf] %v238
  // Predicated region
  $region14: #{osnet_forward.10} parent=0 // pred_check
    _
  $region15: #{osnet_forward.10} parent=0 // pred_check_branch
    %248 = sbr.rel (0) target = $region17
  $region16: #{osnet_forward.10} parent=0 // pred_region
    _
  $region17: #{osnet_forward.10} parent=0 // pred_fallthru
    _
  // Predicated region
  $region18: #{osnet_forward.10} parent=0 // pred_check
    _
  $region19: #{osnet_forward.10} parent=0 // pred_check_branch
    %250 = sbr.rel (0) target = $region21
  $region20: #{osnet_forward.10} parent=0 // pred_region
    _
  $region21: #{osnet_forward.10} parent=0 // pred_fallthru
    _

// kernel: osnet_forward.11
$region0: #{osnet_forward.11}
  #allocation0 [shape = 'u32[]', space=smem, size = 0x4, offset = 0x4, fixed_abs, tag = 'smem constant byte address 0x4 - core index']
  #allocation1 [shape = 'u32[144,128]{1,0:T(1,128)}', space=vmem, size = 0x12000, scoped, tag = 'internal scratch']
  %s0 = inlined_call_operand.vmem [shape: bf16[32,24], index: 0, kind: input, shape index: {}]
  %s1 = inlined_call_operand.vmem [shape: bf16[24,128], index: 1, kind: input, shape index: {}]
  %s2 = inlined_call_operand.vmem [shape: f32[1,128], index: 2, kind: input, shape index: {}]
  %s3 = inlined_call_operand.vmem [shape: bf16[32,128], index: 3, kind: output, shape index: {}]
  %s4 = sld [smem:[#allocation0]]
  $region22: #{osnet_forward.11} parent=0
    _
  %s6 = ssub.s32 1, %s4
  %s7 = scalar_select 0, %s6, %s4
  // Predicated region
  $region2: #{osnet_forward.11} parent=0 // pred_check
    _
  $region3: #{osnet_forward.11} parent=0 // pred_check_branch
    %9 = sbr.rel (0) target = $region5
  $region4: #{osnet_forward.11} parent=0 // pred_region
    _
  $region5: #{osnet_forward.11} parent=0 // pred_fallthru
    _
  // Predicated region
  $region6: #{osnet_forward.11} parent=0 // pred_check
    _
  $region7: #{osnet_forward.11} parent=0 // pred_check_branch
    %11 = sbr.rel (0) target = $region9
  $region8: #{osnet_forward.11} parent=0 // pred_region
    _
  $region9: #{osnet_forward.11} parent=0 // pred_fallthru
    _
  // Predicated region
  $region10: #{osnet_forward.11} parent=0 // pred_check
    _
  $region11: #{osnet_forward.11} parent=0 // pred_check_branch
    %13 = sbr.rel (0) target = $region13
  $region12: #{osnet_forward.11} parent=0 // pred_region
    _
  $region13: #{osnet_forward.11} parent=0 // pred_fallthru
    _
  %v15 = vld [vmem:[%s0] sm:$0xf]
  %v16 = vld [vmem:[%s0 + $0x4] sm:$0xf]
  %v17 = vld [vmem:[%s0 + $0x8] sm:$0xf]
  %v18 = vld [vmem:[%s0 + $0xc] sm:$0xf]
  %v19 = vld [vmem:[%s1] sm:$0xf]
  %v20 = vld [vmem:[%s1 + $0x4] sm:$0xf]
  %v21 = vld [vmem:[%s1 + $0x8] sm:$0xf]
  %v22 = vld [vmem:[%s2] sm:$0x1]
  %v24 = vlaneseq
  %v25 = vshrl.u32 %v24, 7
  %v26 = vsub.s32 0, %v25
  %v27 = vrot.slane %v22, %v26
  %v33 = vunpack.c.l.b16 %v15
  %v34 = vunpack.c.l.b16 %v16
  %v35 = vunpack.c.l.b16 %v17
  %v36 = vunpack.c.l.b16 %v18
  %v37 = vpack.c.b16 %v34, %v33
  %v38 = vpack.c.b16 %v36, %v35
  %v42 = vunpack.c.l.b16 %v19
  %v43 = vunpack.c.l.b16 %v20
  %v44 = vunpack.c.l.b16 %v21
  %v45 = vpack.c.b16 %v43, %v42
  %v46 = vpack.c.b16 %v44, %v44
  %vm48 = vcmask 195584
  %v50 = vsel %vm48, %v37, 0
  %v53 = vsel %vm48, %v38, 0
  %vm55 = vcmask 1043456
  %v57 = vsel %vm55, %v46, 0
  %59 = vmatprep.subr.bf16.mxu0 0
  %60 = vmatpush1.bf16.msra.mxu0 %v45
  %61 = vmatprep.subr.bf16.mxu0 0
  %62 = vmatpush1.bf16.msra.mxu0 %v57
  %63 = vmatprep.subr.bf16.mxu0 0
  %64 = vmatpush1.bf16.msra.mxu0 0
  %65 = vmatprep.subr.bf16.mxu0 0
  %66 = vmatpush1.bf16.msra.mxu0 0
  %67 = vmatprep.subr.bf16.mxu0 0
  %68 = vmatpush1.bf16.msra.mxu0 0
  %69 = vmatprep.subr.bf16.mxu0 0
  %70 = vmatpush1.bf16.msra.mxu0 0
  %71 = vmatprep.subr.bf16.mxu0 0
  %72 = vmatpush1.bf16.msra.mxu0 0
  %73 = vmatprep.subr.bf16.mxu0 0
  %74 = vmatpush1.bf16.msra.mxu0 0
  %75 = vmatprep.subr.bf16.mxu0 0
  %76 = vmatpush1.bf16.msra.mxu0 0
  %77 = vmatprep.subr.bf16.mxu0 0
  %78 = vmatpush1.bf16.msra.mxu0 0
  %79 = vmatprep.subr.bf16.mxu0 0
  %80 = vmatpush1.bf16.msra.mxu0 0
  %81 = vmatprep.subr.bf16.mxu0 0
  %82 = vmatpush1.bf16.msra.mxu0 0
  %83 = vmatprep.subr.bf16.mxu0 0
  %84 = vmatpush1.bf16.msra.mxu0 0
  %85 = vmatprep.subr.bf16.mxu0 0
  %86 = vmatpush1.bf16.msra.mxu0 0
  %87 = vmatprep.subr.bf16.mxu0 0
  %88 = vmatpush1.bf16.msra.mxu0 0
  %89 = vmatprep.subr.bf16.mxu0 0
  %90 = vmatpush1.bf16.msra.mxu0 0
  %91 = vmatprep.mubr.bf16.mxu0 0
  %92 = vmatmul.mubr.bf16.gmra.mrb[0].mxu0 %v50
  %v93 = vpop.f32.mrb[0].mxu0
  %v94 = vadd.f32 %v27, %v93
  %v95 = vpop.f32.mrb[0].mxu0
  %v96 = vpop.f32.mrb[0].mxu0
  %v97 = vadd.f32 %v27, %v96
  %v98 = vpop.f32.mrb[0].mxu0
  %99 = vmatprep.mubr.bf16.mxu0 0
  %100 = vmatmul.mubr.bf16.gmra.mrb[0].mxu0 %v53
  %v101 = vpop.f32.mrb[0].mxu0
  %v102 = vadd.f32 %v27, %v101
  %v103 = vpop.f32.mrb[0].mxu0
  %v104 = vpop.f32.mrb[0].mxu0
  %v105 = vadd.f32 %v27, %v104
  %v106 = vpop.f32.mrb[0].mxu0
  %107 = vdwg.mxu0
  %v108 = vmax.f32 %v94, 0.0
  %v109 = vmax.f32 %v97, 0.0
  %v110 = vmax.f32 %v102, 0.0
  %v111 = vmax.f32 %v105, 0.0
  %v112 = vpack.c.bf16 %v109, %v108
  %v113 = vpack.c.bf16 %v111, %v110
  %v116 = vunpack.c.l.b16 %v112
  %v117 = vunpack.c.h.b16 %v112
  %v118 = vunpack.c.l.b16 %v113
  %v119 = vunpack.c.h.b16 %v113
  %v120 = vpack.c.b16 %v116, %v116
  %v121 = vpack.c.b16 %v117, %v117
  %v122 = vpack.c.b16 %v118, %v118
  %v123 = vpack.c.b16 %v119, %v119
  %128 = vst [vmem:[%s3] sm:$0xf] %v120
  %129 = vst [vmem:[%s3 + $0x4] sm:$0xf] %v121
  %130 = vst [vmem:[%s3 + $0x8] sm:$0xf] %v122
  %131 = vst [vmem:[%s3 + $0xc] sm:$0xf] %v123
  // Predicated region
  $region14: #{osnet_forward.11} parent=0 // pred_check
    _
  $region15: #{osnet_forward.11} parent=0 // pred_check_branch
    %133 = sbr.rel (0) target = $region17
  $region16: #{osnet_forward.11} parent=0 // pred_region
    _
  $region17: #{osnet_forward.11} parent=0 // pred_fallthru
    _
  // Predicated region
  $region18: #{osnet_forward.11} parent=0 // pred_check
    _
  $region19: #{osnet_forward.11} parent=0 // pred_check_branch
    %135 = sbr.rel (0) target = $region21
  $region20: #{osnet_forward.11} parent=0 // pred_region
    _
  $region21: #{osnet_forward.11} parent=0 // pred_fallthru
    _

// kernel: osnet_forward.12
$region0: #{osnet_forward.12}
  #allocation0 [shape = 'u32[]', space=smem, size = 0x4, offset = 0x4, fixed_abs, tag = 'smem constant byte address 0x4 - core index']
  #allocation1 [shape = 'u32[144,128]{1,0:T(1,128)}', space=vmem, size = 0x12000, scoped, tag = 'internal scratch']
  %s0 = inlined_call_operand.vmem [shape: bf16[8,256], index: 0, kind: input, shape index: {}]
  %s1 = inlined_call_operand.vmem [shape: bf16[256,128], index: 1, kind: input, shape index: {}]
  %s2 = inlined_call_operand.vmem [shape: f32[1,128], index: 2, kind: input, shape index: {}]
  %s3 = inlined_call_operand.vmem [shape: bf16[8,128], index: 3, kind: output, shape index: {}]
  %s4 = sld [smem:[#allocation0]]
  $region22: #{osnet_forward.12} parent=0
    _
  %s6 = ssub.s32 1, %s4
  %s7 = scalar_select 0, %s6, %s4
  // Predicated region
  $region2: #{osnet_forward.12} parent=0 // pred_check
    _
  $region3: #{osnet_forward.12} parent=0 // pred_check_branch
    %9 = sbr.rel (0) target = $region5
  $region4: #{osnet_forward.12} parent=0 // pred_region
    _
  $region5: #{osnet_forward.12} parent=0 // pred_fallthru
    _
  // Predicated region
  $region6: #{osnet_forward.12} parent=0 // pred_check
    _
  $region7: #{osnet_forward.12} parent=0 // pred_check_branch
    %11 = sbr.rel (0) target = $region9
  $region8: #{osnet_forward.12} parent=0 // pred_region
    _
  $region9: #{osnet_forward.12} parent=0 // pred_fallthru
    _
  // Predicated region
  $region10: #{osnet_forward.12} parent=0 // pred_check
    _
  $region11: #{osnet_forward.12} parent=0 // pred_check_branch
    %13 = sbr.rel (0) target = $region13
  $region12: #{osnet_forward.12} parent=0 // pred_region
    _
  $region13: #{osnet_forward.12} parent=0 // pred_fallthru
    _
  %v15 = vld [vmem:[%s0] sm:$0xff]
  %v16 = vld [vmem:[%s1] sm:$0xf]
  %v17 = vld [vmem:[%s1 + $0x4] sm:$0xf]
  %v18 = vld [vmem:[%s1 + $0x8] sm:$0xf]
  %v19 = vld [vmem:[%s1 + $0xc] sm:$0xf]
  %v20 = vld [vmem:[%s1 + $0x10] sm:$0xf]
  %v21 = vld [vmem:[%s1 + $0x14] sm:$0xf]
  %v22 = vld [vmem:[%s1 + $0x18] sm:$0xf]
  %v23 = vld [vmem:[%s1 + $0x1c] sm:$0xf]
  %v24 = vld [vmem:[%s1 + $0x20] sm:$0xf]
  %v25 = vld [vmem:[%s1 + $0x24] sm:$0xf]
  %v26 = vld [vmem:[%s1 + $0x28] sm:$0xf]
  %v27 = vld [vmem:[%s1 + $0x2c] sm:$0xf]
  %v28 = vld [vmem:[%s1 + $0x30] sm:$0xf]
  %v29 = vld [vmem:[%s1 + $0x34] sm:$0xf]
  %v30 = vld [vmem:[%s1 + $0x38] sm:$0xf]
  %v31 = vld [vmem:[%s1 + $0x3c] sm:$0xf]
  %v32 = vld [vmem:[%s1 + $0x40] sm:$0xf]
  %v33 = vld [vmem:[%s1 + $0x44] sm:$0xf]
  %v34 = vld [vmem:[%s1 + $0x48] sm:$0xf]
  %v35 = vld [vmem:[%s1 + $0x4c] sm:$0xf]
  %v36 = vld [vmem:[%s1 + $0x50] sm:$0xf]
  %v37 = vld [vmem:[%s1 + $0x54] sm:$0xf]
  %v38 = vld [vmem:[%s1 + $0x58] sm:$0xf]
  %v39 = vld [vmem:[%s1 + $0x5c] sm:$0xf]
  %v40 = vld [vmem:[%s1 + $0x60] sm:$0xf]
  %v41 = vld [vmem:[%s1 + $0x64] sm:$0xf]
  %v42 = vld [vmem:[%s1 + $0x68] sm:$0xf]
  %v43 = vld [vmem:[%s1 + $0x6c] sm:$0xf]
  %v44 = vld [vmem:[%s1 + $0x70] sm:$0xf]
  %v45 = vld [vmem:[%s1 + $0x74] sm:$0xf]
  %v46 = vld [vmem:[%s1 + $0x78] sm:$0xf]
  %v47 = vld [vmem:[%s1 + $0x7c] sm:$0xf]
  %v48 = vld [vmem:[%s2] sm:$0x1]
  %v50 = vlaneseq
  %v51 = vshrl.u32 %v50, 7
  %v52 = vsub.s32 0, %v51
  %v53 = vrot.slane %v48, %v52
  %v56 = vunpack.c.l.b16 %v15
  %v57 = vunpack.c.h.b16 %v15
  %v58 = vpack.c.b16 %v56, %v56
  %v59 = vpack.c.b16 %v57, %v57
  %v94 = vunpack.c.l.b16 %v16
  %v95 = vunpack.c.l.b16 %v17
  %v96 = vunpack.c.l.b16 %v18
  %v97 = vunpack.c.l.b16 %v19
  %v98 = vunpack.c.l.b16 %v20
  %v99 = vunpack.c.l.b16 %v21
  %v100 = vunpack.c.l.b16 %v22
  %v101 = vunpack.c.l.b16 %v23
  %v102 = vunpack.c.l.b16 %v24
  %v103 = vunpack.c.l.b16 %v25
  %v104 = vunpack.c.l.b16 %v26
  %v105 = vunpack.c.l.b16 %v27
  %v106 = vunpack.c.l.b16 %v28
  %v107 = vunpack.c.l.b16 %v29
  %v108 = vunpack.c.l.b16 %v30
  %v109 = vunpack.c.l.b16 %v31
  %v110 = vunpack.c.l.b16 %v32
  %v111 = vunpack.c.l.b16 %v33
  %v112 = vunpack.c.l.b16 %v34
  %v113 = vunpack.c.l.b16 %v35
  %v114 = vunpack.c.l.b16 %v36
  %v115 = vunpack.c.l.b16 %v37
  %v116 = vunpack.c.l.b16 %v38
  %v117 = vunpack.c.l.b16 %v39
  %v118 = vunpack.c.l.b16 %v40
  %v119 = vunpack.c.l.b16 %v41
  %v120 = vunpack.c.l.b16 %v42
  %v121 = vunpack.c.l.b16 %v43
  %v122 = vunpack.c.l.b16 %v44
  %v123 = vunpack.c.l.b16 %v45
  %v124 = vunpack.c.l.b16 %v46
  %v125 = vunpack.c.l.b16 %v47
  %v126 = vpack.c.b16 %v95, %v94
  %v127 = vpack.c.b16 %v97, %v96
  %v128 = vpack.c.b16 %v99, %v98
  %v129 = vpack.c.b16 %v101, %v100
  %v130 = vpack.c.b16 %v103, %v102
  %v131 = vpack.c.b16 %v105, %v104
  %v132 = vpack.c.b16 %v107, %v106
  %v133 = vpack.c.b16 %v109, %v108
  %v134 = vpack.c.b16 %v111, %v110
  %v135 = vpack.c.b16 %v113, %v112
  %v136 = vpack.c.b16 %v115, %v114
  %v137 = vpack.c.b16 %v117, %v116
  %v138 = vpack.c.b16 %v119, %v118
  %v139 = vpack.c.b16 %v121, %v120
  %v140 = vpack.c.b16 %v123, %v122
  %v141 = vpack.c.b16 %v125, %v124
  %158 = vmatprep.subr.bf16.mxu0 0
  %159 = vmatpush1.bf16.msra.mxu0 %v126
  %160 = vmatprep.subr.bf16.mxu0 0
  %161 = vmatpush1.bf16.msra.mxu0 %v127
  %162 = vmatprep.subr.bf16.mxu0 0
  %163 = vmatpush1.bf16.msra.mxu0 %v128
  %164 = vmatprep.subr.bf16.mxu0 0
  %165 = vmatpush1.bf16.msra.mxu0 %v129
  %166 = vmatprep.subr.bf16.mxu0 0
  %167 = vmatpush1.bf16.msra.mxu0 %v130
  %168 = vmatprep.subr.bf16.mxu0 0
  %169 = vmatpush1.bf16.msra.mxu0 %v131
  %170 = vmatprep.subr.bf16.mxu0 0
  %171 = vmatpush1.bf16.msra.mxu0 %v132
  %172 = vmatprep.subr.bf16.mxu0 0
  %173 = vmatpush1.bf16.msra.mxu0 %v133
  %174 = vmatprep.subr.bf16.mxu0 0
  %175 = vmatpush1.bf16.msra.mxu0 %v134
  %176 = vmatprep.subr.bf16.mxu0 0
  %177 = vmatpush1.bf16.msra.mxu0 %v135
  %178 = vmatprep.subr.bf16.mxu0 0
  %179 = vmatpush1.bf16.msra.mxu0 %v136
  %180 = vmatprep.subr.bf16.mxu0 0
  %181 = vmatpush1.bf16.msra.mxu0 %v137
  %182 = vmatprep.subr.bf16.mxu0 0
  %183 = vmatpush1.bf16.msra.mxu0 %v138
  %184 = vmatprep.subr.bf16.mxu0 0
  %185 = vmatpush1.bf16.msra.mxu0 %v139
  %186 = vmatprep.subr.bf16.mxu0 0
  %187 = vmatpush1.bf16.msra.mxu0 %v140
  %188 = vmatprep.subr.bf16.mxu0 0
  %189 = vmatpush1.bf16.msra.mxu0 %v141
  %190 = vmatprep.mubr.bf16.mxu0 %v59
  %191 = vmatmul.mubr.bf16.gmra.mrb[0].mxu0 %v58
  %v192 = vpop.f32.mrb[0].mxu0
  %v193 = vadd.f32 %v53, %v192
  %v194 = vpop.f32.mrb[0].mxu0
  %v195 = vpop.f32.mrb[0].mxu0
  %v196 = vpop.f32.mrb[0].mxu0
  %197 = vdwg.mxu0
  %v198 = vmax.f32 %v193, 0.0
  %v199 = vpack.c.bf16 %v198, %v198
  %200 = vst [vmem:[%s3] sm:$0xf] %v199
  // Predicated region
  $region14: #{osnet_forward.12} parent=0 // pred_check
    _
  $region15: #{osnet_forward.12} parent=0 // pred_check_branch
    %202 = sbr.rel (0) target = $region17
  $region16: #{osnet_forward.12} parent=0 // pred_region
    _
  $region17: #{osnet_forward.12} parent=0 // pred_fallthru
    _
  // Predicated region
  $region18: #{osnet_forward.12} parent=0 // pred_check
    _
  $region19: #{osnet_forward.12} parent=0 // pred_check_branch
    %204 = sbr.rel (0) target = $region21
  $region20: #{osnet_forward.12} parent=0 // pred_region
    _
  $region21: #{osnet_forward.12} parent=0 // pred_fallthru
    _

// kernel: osnet_forward.13
$region0: #{osnet_forward.13}
  #allocation0 [shape = 'u32[]', space=smem, size = 0x4, offset = 0x4, fixed_abs, tag = 'smem constant byte address 0x4 - core index']
  #allocation1 [shape = 'u32[144,128]{1,0:T(1,128)}', space=vmem, size = 0x12000, scoped, tag = 'internal scratch']
  %s0 = inlined_call_operand.vmem [shape: bf16[8,32], index: 0, kind: input, shape index: {}]
  %s1 = inlined_call_operand.vmem [shape: bf16[32,128], index: 1, kind: input, shape index: {}]
  %s2 = inlined_call_operand.vmem [shape: f32[1,128], index: 2, kind: input, shape index: {}]
  %s3 = inlined_call_operand.vmem [shape: bf16[8,128], index: 3, kind: output, shape index: {}]
  %s4 = sld [smem:[#allocation0]]
  $region22: #{osnet_forward.13} parent=0
    _
  %s6 = ssub.s32 1, %s4
  %s7 = scalar_select 0, %s6, %s4
  // Predicated region
  $region2: #{osnet_forward.13} parent=0 // pred_check
    _
  $region3: #{osnet_forward.13} parent=0 // pred_check_branch
    %9 = sbr.rel (0) target = $region5
  $region4: #{osnet_forward.13} parent=0 // pred_region
    _
  $region5: #{osnet_forward.13} parent=0 // pred_fallthru
    _
  // Predicated region
  $region6: #{osnet_forward.13} parent=0 // pred_check
    _
  $region7: #{osnet_forward.13} parent=0 // pred_check_branch
    %11 = sbr.rel (0) target = $region9
  $region8: #{osnet_forward.13} parent=0 // pred_region
    _
  $region9: #{osnet_forward.13} parent=0 // pred_fallthru
    _
  // Predicated region
  $region10: #{osnet_forward.13} parent=0 // pred_check
    _
  $region11: #{osnet_forward.13} parent=0 // pred_check_branch
    %13 = sbr.rel (0) target = $region13
  $region12: #{osnet_forward.13} parent=0 // pred_region
    _
  $region13: #{osnet_forward.13} parent=0 // pred_fallthru
    _
  %v15 = vld [vmem:[%s0] sm:$0xf]
  %v16 = vld [vmem:[%s1] sm:$0xf]
  %v17 = vld [vmem:[%s1 + $0x4] sm:$0xf]
  %v18 = vld [vmem:[%s1 + $0x8] sm:$0xf]
  %v19 = vld [vmem:[%s1 + $0xc] sm:$0xf]
  %v20 = vld [vmem:[%s2] sm:$0x1]
  %v22 = vlaneseq
  %v23 = vshrl.u32 %v22, 7
  %v24 = vsub.s32 0, %v23
  %v25 = vrot.slane %v20, %v24
  %v31 = vunpack.c.l.b16 %v16
  %v32 = vunpack.c.l.b16 %v17
  %v33 = vunpack.c.l.b16 %v18
  %v34 = vunpack.c.l.b16 %v19
  %v35 = vpack.c.b16 %v32, %v31
  %v36 = vpack.c.b16 %v34, %v33
  %vm39 = vcmask 261120
  %v41 = vsel %vm39, %v15, 0
  %43 = vmatprep.subr.bf16.mxu0 0
  %44 = vmatpush1.bf16.msra.mxu0 %v35
  %45 = vmatprep.subr.bf16.mxu0 0
  %46 = vmatpush1.bf16.msra.mxu0 %v36
  %47 = vmatprep.subr.bf16.mxu0 0
  %48 = vmatpush1.bf16.msra.mxu0 0
  %49 = vmatprep.subr.bf16.mxu0 0
  %50 = vmatpush1.bf16.msra.mxu0 0
  %51 = vmatprep.subr.bf16.mxu0 0
  %52 = vmatpush1.bf16.msra.mxu0 0
  %53 = vmatprep.subr.bf16.mxu0 0
  %54 = vmatpush1.bf16.msra.mxu0 0
  %55 = vmatprep.subr.bf16.mxu0 0
  %56 = vmatpush1.bf16.msra.mxu0 0
  %57 = vmatprep.subr.bf16.mxu0 0
  %58 = vmatpush1.bf16.msra.mxu0 0
  %59 = vmatprep.subr.bf16.mxu0 0
  %60 = vmatpush1.bf16.msra.mxu0 0
  %61 = vmatprep.subr.bf16.mxu0 0
  %62 = vmatpush1.bf16.msra.mxu0 0
  %63 = vmatprep.subr.bf16.mxu0 0
  %64 = vmatpush1.bf16.msra.mxu0 0
  %65 = vmatprep.subr.bf16.mxu0 0
  %66 = vmatpush1.bf16.msra.mxu0 0
  %67 = vmatprep.subr.bf16.mxu0 0
  %68 = vmatpush1.bf16.msra.mxu0 0
  %69 = vmatprep.subr.bf16.mxu0 0
  %70 = vmatpush1.bf16.msra.mxu0 0
  %71 = vmatprep.subr.bf16.mxu0 0
  %72 = vmatpush1.bf16.msra.mxu0 0
  %73 = vmatprep.subr.bf16.mxu0 0
  %74 = vmatpush1.bf16.msra.mxu0 0
  %75 = vmatprep.mubr.bf16.mxu0 0
  %76 = vmatmul.mubr.bf16.gmra.mrb[0].mxu0 %v41
  %v77 = vpop.f32.mrb[0].mxu0
  %v78 = vadd.f32 %v25, %v77
  %v79 = vpop.f32.mrb[0].mxu0
  %v80 = vpop.f32.mrb[0].mxu0
  %v81 = vpop.f32.mrb[0].mxu0
  %82 = vdwg.mxu0
  %v83 = vmax.f32 %v78, 0.0
  %v84 = vpack.c.bf16 %v83, %v83
  %85 = vst [vmem:[%s3] sm:$0xf] %v84
  // Predicated region
  $region14: #{osnet_forward.13} parent=0 // pred_check
    _
  $region15: #{osnet_forward.13} parent=0 // pred_check_branch
    %87 = sbr.rel (0) target = $region17
  $region16: #{osnet_forward.13} parent=0 // pred_region
    _
  $region17: #{osnet_forward.13} parent=0 // pred_fallthru
    _
  // Predicated region
  $region18: #{osnet_forward.13} parent=0 // pred_check
    _
  $region19: #{osnet_forward.13} parent=0 // pred_check_branch
    %89 = sbr.rel (0) target = $region21
  $region20: #{osnet_forward.13} parent=0 // pred_region
    _
  $region21: #{osnet_forward.13} parent=0 // pred_fallthru
    _

</llo_original>
